<compile_context>
chip_gen: v6e
topology: v6e:2x2x1
jax: 0.10.0
libtpu: 0.0.40
codegen_flags: <defaults>
</compile_context>

<pallas_src>
import math

import jax
import jax.numpy as jnp
from jax.experimental import pallas as pl
from jax.experimental.pallas import tpu as pltpu

# ----------------------------- model config ---------------------------------
EMB = 32            # emb_size / d_model
NHEAD = 4
DH = EMB // NHEAD   # head dim
NUM_LAYERS = 2      # num_encoder_layers
FFN = 64            # dim_feedforward
SRC_VOCAB = 50
TGT_VOCAB = 10
SEQ = 8
BATCH = 2
EPS = 1e-5

# ----------------------------- weight-slab layout ---------------------------
def _align8(x):
    return (x + 7) // 8 * 8

EMB_OFF = 0                                      # emb table (SRC_VOCAB, E)
PE_OFF = _align8(SRC_VOCAB)                      # 56 : pre-tiled PE (N*S, E)
MASK_OFF = PE_OFF + BATCH * SEQ                  # 72 : bd/seg masks (H*S, ...)
LAYER_OFF = MASK_OFF + NHEAD * SEQ               # 104
LAYER_ROWS = 2 * EMB + FFN                       # 128 rows per layer
GEN_OFF = LAYER_OFF + NUM_LAYERS * LAYER_ROWS    # 360 : generator W (E, 128)
BIAS_OFF = GEN_OFF + EMB                         # 392 : (L+1) groups of 8 rows
SLAB_ROWS = BIAS_OFF + (NUM_LAYERS + 1) * 8      # 416


# ----------------------------- kernel ----------------------------------------
def _layer_norm(x, w, b):
    mu = jnp.mean(x, axis=-1, keepdims=True)
    var = jnp.mean((x - mu) ** 2, axis=-1, keepdims=True)
    return (x - mu) * jax.lax.rsqrt(var + EPS) * w + b


def _fused_kernel(tok_ref, w_ref, out_ref, xbuf_ref):
    """Whole forward pass in one kernel.

    tok_ref  : (S, N) int32 in SMEM
    w_ref    : (SLAB_ROWS, 128) f32 in VMEM (all weights / tables / biases)
    out_ref  : (N, 128) f32 (lane-dense; logits live in lanes [:TGT_VOCAB])
    xbuf_ref : (N*S, 128) f32 VMEM scratch for the embedding gather
    """
    ns = BATCH * SEQ

    # ---- token-embedding gather (table pre-scaled by sqrt(E)) --------------
    for t in range(ns):                           # static unroll, 16 rows
        nn, ss = divmod(t, SEQ)                   # row layout: n*S + s
        tok = tok_ref[ss, nn]                     # scalar read from SMEM
        xbuf_ref[pl.ds(t, 1), :] = w_ref[pl.ds(EMB_OFF + tok, 1), :]

    # ---- + positional encoding (pre-tiled to (N*S, E) at pack time) --------
    xfull = xbuf_ref[...] + w_ref[PE_OFF:PE_OFF + ns, :]
    x2 = xfull[:, 0:EMB]                          # (N*S, E) f32

    # attention masks, hoisted out of the layer loop (constants from the slab)
    mblk = w_ref[MASK_OFF:MASK_OFF + NHEAD * SEQ, :]
    bd_mask = mblk[:, 0:EMB]                      # (H*S, E):  head(row)==head(col)
    seg_mask = mblk[:, EMB:EMB + NHEAD * SEQ]     # (H*S, H*S): same-head segment sum

    for l in range(NUM_LAYERS):                   # static unroll
        lo = LAYER_OFF + l * LAYER_ROWS
        blk_a = w_ref[lo:lo + EMB, :]                               # [Wqkv | Wo]
        wqkv = blk_a[:, 0:3 * EMB]                                  # (E, 3E)
        wo = blk_a[:, 3 * EMB:4 * EMB]                              # (E, E)
        w1 = w_ref[lo + EMB:lo + 2 * EMB, :][:, 0:FFN]              # (E, FFN)
        w2 = w_ref[lo + 2 * EMB:lo + 2 * EMB + FFN, :][:, 0:EMB]    # (FFN, E)

        bias = w_ref[BIAS_OFF + l * 8:BIAS_OFF + (l + 1) * 8, :]    # (8, 128)
        bqkv = bias[0:1, 0:3 * EMB]
        b_o = bias[1:2, 0:EMB]
        b1 = bias[2:3, 0:FFN]
        b2 = bias[3:4, 0:EMB]
        ln1w = bias[4:5, 0:EMB]
        ln1b = bias[5:6, 0:EMB]
        ln2w = bias[6:7, 0:EMB]
        ln2b = bias[7:8, 0:EMB]

        # ---- multi-head self-attention (Q pre-scaled by 1/sqrt(dh)) --------
        qkv = jnp.dot(x2, wqkv, preferred_element_type=jnp.float32) + bqkv

        ctx_rows = []
        for b in range(BATCH):                    # static, N = 2
            r0 = b * SEQ
            q_n = qkv[r0:r0 + SEQ, 0:EMB]                 # (S, E)
            k_n = qkv[r0:r0 + SEQ, EMB:2 * EMB]
            v_n = qkv[r0:r0 + SEQ, 2 * EMB:3 * EMB]
            # block-diagonal K / V: all heads handled by one wide operand
            k_bd = jnp.concatenate([k_n] * NHEAD, axis=0) * bd_mask   # (H*S, E)
            v_bd = jnp.concatenate([v_n] * NHEAD, axis=0) * bd_mask
            # scores for all heads at once: (S, H*S), column j = (head, key)
            sc = jnp.einsum('qe,ke->qk', q_n, k_bd,
                            preferred_element_type=jnp.float32)
            sc = sc - jnp.max(sc, axis=-1, keepdims=True)  # row-wide stabiliser
            p = jnp.exp(sc)
            # per-head softmax denominator, broadcast back via one matmul
            den = jnp.dot(p, seg_mask, preferred_element_type=jnp.float32)
            p = p / den                                    # exact divide
            # context already comes out head-concatenated along lanes: (S, E)
            ctx_rows.append(
                jnp.dot(p, v_bd, preferred_element_type=jnp.float32))
        ctx = jnp.concatenate(ctx_rows, axis=0)            # (N*S, E)
        attn = jnp.dot(ctx, wo, preferred_element_type=jnp.float32) + b_o

        # ---- post-norm residual blocks --------------------------------------
        y = _layer_norm(x2 + attn, ln1w, ln1b)
        h1 = jnp.maximum(
            jnp.dot(y, w1, preferred_element_type=jnp.float32) + b1, 0.0)
        h2 = jnp.dot(h1, w2, preferred_element_type=jnp.float32) + b2
        x2 = _layer_norm(y + h2, ln2w, ln2b)

    # ---- final encoder LN + mean over seq + generator (lane-dense store) ----
    fb = w_ref[BIAS_OFF + NUM_LAYERS * 8:BIAS_OFF + (NUM_LAYERS + 1) * 8, :]
    enc_w = fb[0:1, 0:EMB]
    enc_b = fb[1:2, 0:EMB]
    gen_b = fb[2:3, :]                                     # (1, 128) zero-padded
    y = _layer_norm(x2, enc_w, enc_b)                      # (N*S, E)
    pooled = jnp.mean(y.reshape(BATCH, SEQ, EMB), axis=1)  # (N, E)
    gen_w = w_ref[GEN_OFF:GEN_OFF + EMB, :]                # (E, 128) zero-padded
    out_ref[...] = (jnp.dot(pooled, gen_w,
                            preferred_element_type=jnp.float32)
                    + gen_b).astype(out_ref.dtype)


# ----------------------------- pallas wrapper --------------------------------
def _fused_call(tokens, wslab):
    return pl.pallas_call(
        _fused_kernel,
        out_shape=jax.ShapeDtypeStruct((BATCH, 128), jnp.float32),
        in_specs=[
            pl.BlockSpec(memory_space=pltpu.MemorySpace.SMEM),   # token ids
            pl.BlockSpec(memory_space=pltpu.MemorySpace.VMEM),   # weight slab
        ],
        out_specs=pl.BlockSpec(memory_space=pltpu.MemorySpace.VMEM),
        scratch_shapes=[pltpu.VMEM((BATCH * SEQ, 128), jnp.float32)],
    )(tokens, wslab)


@jax.jit
def transformer_encoder_only_forward(src_tokens, wslab):
    """src_tokens: (S, N) int32 token ids (seq-first). Returns (N, TGT)."""
    padded = _fused_call(src_tokens, wslab)        # (N, 128) lane-dense
    return padded[:, :TGT_VOCAB]


# ----------------------------- parameters / packing --------------------------
def _xavier(key, shape):
    fan_out, fan_in = shape
    bound = math.sqrt(6.0 / (fan_in + fan_out))
    return jax.random.uniform(key, shape, jnp.float32, -bound, bound)


def init_params(key):
    """Torch-layout parameters (Linear weights are (out, in))."""
    keys = jax.random.split(key, 2 + 4 * NUM_LAYERS)
    ki = iter(keys)
    emb_table = jax.random.normal(next(ki), (SRC_VOCAB, EMB), jnp.float32) * 0.02
    layers = []
    for _ in range(NUM_LAYERS):
        layers.append(dict(
            wqkv=_xavier(next(ki), (3 * EMB, EMB)),
            bqkv=jnp.zeros((3 * EMB,), jnp.float32),
            wo=_xavier(next(ki), (EMB, EMB)),
            bo=jnp.zeros((EMB,), jnp.float32),
            ln1w=jnp.ones((EMB,), jnp.float32),
            ln1b=jnp.zeros((EMB,), jnp.float32),
            w1=_xavier(next(ki), (FFN, EMB)),
            b1=jnp.zeros((FFN,), jnp.float32),
            w2=_xavier(next(ki), (EMB, FFN)),
            b2=jnp.zeros((EMB,), jnp.float32),
            ln2w=jnp.ones((EMB,), jnp.float32),
            ln2b=jnp.zeros((EMB,), jnp.float32),
        ))
    return dict(
        emb=emb_table, layers=layers,
        enc_norm_w=jnp.ones((EMB,), jnp.float32),
        enc_norm_b=jnp.zeros((EMB,), jnp.float32),
        gen_w=_xavier(next(ki), (TGT_VOCAB, EMB)),
        gen_b=jnp.zeros((TGT_VOCAB,), jnp.float32),
    )


def positional_encoding(seq, emb):
    den = jnp.exp(-jnp.arange(0, emb, 2, dtype=jnp.float32)
                  * (math.log(10000.0) / emb))
    pos = jnp.arange(seq, dtype=jnp.float32)[:, None]
    pe = jnp.zeros((seq, emb), jnp.float32)
    pe = pe.at[:, 0::2].set(jnp.sin(pos * den))
    pe = pe.at[:, 1::2].set(jnp.cos(pos * den))
    return pe  # (S, E)


def pack_params(params):
    """One-time wrapper-side re-layout into a single (SLAB_ROWS, 128) slab:
       - emb table pre-scaled by sqrt(E); PE pre-tiled to (N*S, E),
       - block-diag / segment attention masks baked in as constants,
       - weights transposed to (in, out); 1/sqrt(dh) folded into W_q / b_q,
       - Wqkv and Wo share rows; generator W / b zero-padded to 128 lanes,
       - all biases / LayerNorm vectors in 8-row groups at the tail."""
    scale = 1.0 / math.sqrt(DH)
    slab = jnp.zeros((SLAB_ROWS, 128), jnp.float32)

    slab = slab.at[EMB_OFF:EMB_OFF + SRC_VOCAB, :EMB].set(
        params["emb"] * math.sqrt(EMB))
    pe_tiled = jnp.tile(positional_encoding(SEQ, EMB), (BATCH, 1))   # row n*S+s
    slab = slab.at[PE_OFF:PE_OFF + BATCH * SEQ, :EMB].set(pe_tiled)

    ri = jnp.arange(NHEAD * SEQ)
    ci = jnp.arange(EMB)
    bd_mask = (ri[:, None] // SEQ == ci[None, :] // DH).astype(jnp.float32)
    seg_mask = (ri[:, None] // SEQ == ri[None, :] // SEQ).astype(jnp.float32)
    slab = slab.at[MASK_OFF:MASK_OFF + NHEAD * SEQ, :EMB].set(bd_mask)
    slab = slab.at[MASK_OFF:MASK_OFF + NHEAD * SEQ,
                   EMB:EMB + NHEAD * SEQ].set(seg_mask)

    for l, lp in enumerate(params["layers"]):
        lo = LAYER_OFF + l * LAYER_ROWS
        bo = BIAS_OFF + l * 8
        wqkv_t = lp["wqkv"].T                                # (E, 3E) [q|k|v]
        wqkv_t = wqkv_t.at[:, :EMB].multiply(scale)          # fold attn scale
        bqkv = lp["bqkv"].at[:EMB].multiply(scale)
        slab = slab.at[lo:lo + EMB, 0:3 * EMB].set(wqkv_t)
        slab = slab.at[lo:lo + EMB, 3 * EMB:4 * EMB].set(lp["wo"].T)
        slab = slab.at[lo + EMB:lo + 2 * EMB, 0:FFN].set(lp["w1"].T)
        slab = slab.at[lo + 2 * EMB:lo + 2 * EMB + FFN, 0:EMB].set(lp["w2"].T)
        slab = slab.at[bo + 0, :3 * EMB].set(bqkv)
        slab = slab.at[bo + 1, :EMB].set(lp["bo"])
        slab = slab.at[bo + 2, :FFN].set(lp["b1"])
        slab = slab.at[bo + 3, :EMB].set(lp["b2"])
        slab = slab.at[bo + 4, :EMB].set(lp["ln1w"])
        slab = slab.at[bo + 5, :EMB].set(lp["ln1b"])
        slab = slab.at[bo + 6, :EMB].set(lp["ln2w"])
        slab = slab.at[bo + 7, :EMB].set(lp["ln2b"])

    slab = slab.at[GEN_OFF:GEN_OFF + EMB, :TGT_VOCAB].set(params["gen_w"].T)
    fo = BIAS_OFF + NUM_LAYERS * 8
    slab = slab.at[fo + 0, :EMB].set(params["enc_norm_w"])
    slab = slab.at[fo + 1, :EMB].set(params["enc_norm_b"])
    slab = slab.at[fo + 2, :TGT_VOCAB].set(params["gen_b"])
    return slab


# ----------------------------- pure-JAX reference ----------------------------
_HI = jax.lax.Precision.HIGHEST


def _ref_ln(x, w, b):
    mu = x.mean(-1, keepdims=True)
    var = ((x - mu) ** 2).mean(-1, keepdims=True)
    return (x - mu) * jax.lax.rsqrt(var + EPS) * w + b


def reference_forward(src, params):
    """Mirrors the torch module (eval mode, mask=None)."""
    S, N = src.shape
    x = params["emb"][src] * math.sqrt(EMB) \
        + positional_encoding(S, EMB)[:, None, :]
    for lp in params["layers"]:
        qkv = jnp.einsum("sne,fe->snf", x, lp["wqkv"], precision=_HI) + lp["bqkv"]
        q, k, v = jnp.split(qkv, 3, axis=-1)
        q = q.reshape(S, N, NHEAD, DH) / math.sqrt(DH)
        k = k.reshape(S, N, NHEAD, DH)
        v = v.reshape(S, N, NHEAD, DH)
        sc = jnp.einsum("snhd,tnhd->nhst", q, k, precision=_HI)
        p = jax.nn.softmax(sc, axis=-1)
        ctx = jnp.einsum("nhst,tnhd->snhd", p, v, precision=_HI).reshape(S, N, EMB)
        attn = jnp.einsum("sne,fe->snf", ctx, lp["wo"], precision=_HI) + lp["bo"]
        x = _ref_ln(x + attn, lp["ln1w"], lp["ln1b"])
        h = jax.nn.relu(
            jnp.einsum("sne,fe->snf", x, lp["w1"], precision=_HI) + lp["b1"])
        h = jnp.einsum("snf,ef->sne", h, lp["w2"], precision=_HI) + lp["b2"]
        x = _ref_ln(x + h, lp["ln2w"], lp["ln2b"])
    x = _ref_ln(x, params["enc_norm_w"], params["enc_norm_b"])
    pooled = x.mean(axis=0)                                  # (N, E)
    return jnp.einsum("ne,fe->nf", pooled, params["gen_w"],
                      precision=_HI) + params["gen_b"]


# ----------------------------- main -------------------------------------------
if __name__ == "__main__":
    key = jax.random.PRNGKey(0)
    pkey, tkey = jax.random.split(key)
    params = init_params(pkey)
    wslab = pack_params(params)
    src = jax.random.randint(tkey, (SEQ, BATCH), 0, SRC_VOCAB, dtype=jnp.int32)

    out = transformer_encoder_only_forward(src, wslab)
    out = jax.block_until_ready(out)
    assert out.shape == (BATCH, TGT_VOCAB), out.shape
    assert bool(jnp.all(jnp.isfinite(out)))

    ref = reference_forward(src, params)
    assert bool(jnp.allclose(out, ref, rtol=2e-2, atol=2e-2)), (
        "kernel/reference mismatch: max abs diff = "
        f"{float(jnp.max(jnp.abs(out - ref)))}")
    print("KERNEL_OK")
</pallas_src>

<mosaic_0001>
module attributes {stable_mosaic.version = 11 : i64} {
  func.func @_fused_kernel(%arg0: memref<8x2xi32, #tpu.memory_space<smem>>, %arg1: memref<416x128xf32, #tpu.memory_space<vmem>>, %arg2: memref<2x128xf32, #tpu.memory_space<vmem>>, %arg3: memref<16x128xf32, #tpu.memory_space<vmem>>) attributes {dimension_semantics = [], scalar_prefetch = 0 : i64, scratch_operands = 1 : i64, tpu.core_type = #tpu.core_type<tc>} {
    %c0 = arith.constant 0 : index
    %c0_0 = arith.constant 0 : index
    %0 = memref.load %arg0[%c0, %c0_0] : memref<8x2xi32, #tpu.memory_space<smem>>
    %c0_i32 = arith.constant 0 : i32
    %1 = arith.addi %c0_i32, %0 : i32
    %2 = arith.index_cast %1 : i32 to index
    %c0_1 = arith.constant 0 : index
    %3 = vector.load %arg1[%2, %c0_1] : memref<416x128xf32, #tpu.memory_space<vmem>>, vector<1x128xf32>
    %c0_2 = arith.constant 0 : index
    %c0_3 = arith.constant 0 : index
    %4 = vector.load %arg3[%c0_2, %c0_3] : memref<16x128xf32, #tpu.memory_space<vmem>>, vector<1x128xf32>
    tpu.vector_store %arg3[%c0_2, %c0_3], %3 {strides = array<i32>} : memref<16x128xf32, #tpu.memory_space<vmem>>, vector<1x128xf32>,
    %c1 = arith.constant 1 : index
    %c0_4 = arith.constant 0 : index
    %5 = memref.load %arg0[%c1, %c0_4] : memref<8x2xi32, #tpu.memory_space<smem>>
    %c0_i32_5 = arith.constant 0 : i32
    %6 = arith.addi %c0_i32_5, %5 : i32
    %7 = arith.index_cast %6 : i32 to index
    %c0_6 = arith.constant 0 : index
    %8 = vector.load %arg1[%7, %c0_6] : memref<416x128xf32, #tpu.memory_space<vmem>>, vector<1x128xf32>
    %c1_7 = arith.constant 1 : index
    %c0_8 = arith.constant 0 : index
    %9 = vector.load %arg3[%c1_7, %c0_8] : memref<16x128xf32, #tpu.memory_space<vmem>>, vector<1x128xf32>
    tpu.vector_store %arg3[%c1_7, %c0_8], %8 {strides = array<i32>} : memref<16x128xf32, #tpu.memory_space<vmem>>, vector<1x128xf32>,
    %c2 = arith.constant 2 : index
    %c0_9 = arith.constant 0 : index
    %10 = memref.load %arg0[%c2, %c0_9] : memref<8x2xi32, #tpu.memory_space<smem>>
    %c0_i32_10 = arith.constant 0 : i32
    %11 = arith.addi %c0_i32_10, %10 : i32
    %12 = arith.index_cast %11 : i32 to index
    %c0_11 = arith.constant 0 : index
    %13 = vector.load %arg1[%12, %c0_11] : memref<416x128xf32, #tpu.memory_space<vmem>>, vector<1x128xf32>
    %c2_12 = arith.constant 2 : index
    %c0_13 = arith.constant 0 : index
    %14 = vector.load %arg3[%c2_12, %c0_13] : memref<16x128xf32, #tpu.memory_space<vmem>>, vector<1x128xf32>
    tpu.vector_store %arg3[%c2_12, %c0_13], %13 {strides = array<i32>} : memref<16x128xf32, #tpu.memory_space<vmem>>, vector<1x128xf32>,
    %c3 = arith.constant 3 : index
    %c0_14 = arith.constant 0 : index
    %15 = memref.load %arg0[%c3, %c0_14] : memref<8x2xi32, #tpu.memory_space<smem>>
    %c0_i32_15 = arith.constant 0 : i32
    %16 = arith.addi %c0_i32_15, %15 : i32
    %17 = arith.index_cast %16 : i32 to index
    %c0_16 = arith.constant 0 : index
    %18 = vector.load %arg1[%17, %c0_16] : memref<416x128xf32, #tpu.memory_space<vmem>>, vector<1x128xf32>
    %c3_17 = arith.constant 3 : index
    %c0_18 = arith.constant 0 : index
    %19 = vector.load %arg3[%c3_17, %c0_18] : memref<16x128xf32, #tpu.memory_space<vmem>>, vector<1x128xf32>
    tpu.vector_store %arg3[%c3_17, %c0_18], %18 {strides = array<i32>} : memref<16x128xf32, #tpu.memory_space<vmem>>, vector<1x128xf32>,
    %c4 = arith.constant 4 : index
    %c0_19 = arith.constant 0 : index
    %20 = memref.load %arg0[%c4, %c0_19] : memref<8x2xi32, #tpu.memory_space<smem>>
    %c0_i32_20 = arith.constant 0 : i32
    %21 = arith.addi %c0_i32_20, %20 : i32
    %22 = arith.index_cast %21 : i32 to index
    %c0_21 = arith.constant 0 : index
    %23 = vector.load %arg1[%22, %c0_21] : memref<416x128xf32, #tpu.memory_space<vmem>>, vector<1x128xf32>
    %c4_22 = arith.constant 4 : index
    %c0_23 = arith.constant 0 : index
    %24 = vector.load %arg3[%c4_22, %c0_23] : memref<16x128xf32, #tpu.memory_space<vmem>>, vector<1x128xf32>
    tpu.vector_store %arg3[%c4_22, %c0_23], %23 {strides = array<i32>} : memref<16x128xf32, #tpu.memory_space<vmem>>, vector<1x128xf32>,
    %c5 = arith.constant 5 : index
    %c0_24 = arith.constant 0 : index
    %25 = memref.load %arg0[%c5, %c0_24] : memref<8x2xi32, #tpu.memory_space<smem>>
    %c0_i32_25 = arith.constant 0 : i32
    %26 = arith.addi %c0_i32_25, %25 : i32
    %27 = arith.index_cast %26 : i32 to index
    %c0_26 = arith.constant 0 : index
    %28 = vector.load %arg1[%27, %c0_26] : memref<416x128xf32, #tpu.memory_space<vmem>>, vector<1x128xf32>
    %c5_27 = arith.constant 5 : index
    %c0_28 = arith.constant 0 : index
    %29 = vector.load %arg3[%c5_27, %c0_28] : memref<16x128xf32, #tpu.memory_space<vmem>>, vector<1x128xf32>
    tpu.vector_store %arg3[%c5_27, %c0_28], %28 {strides = array<i32>} : memref<16x128xf32, #tpu.memory_space<vmem>>, vector<1x128xf32>,
    %c6 = arith.constant 6 : index
    %c0_29 = arith.constant 0 : index
    %30 = memref.load %arg0[%c6, %c0_29] : memref<8x2xi32, #tpu.memory_space<smem>>
    %c0_i32_30 = arith.constant 0 : i32
    %31 = arith.addi %c0_i32_30, %30 : i32
    %32 = arith.index_cast %31 : i32 to index
    %c0_31 = arith.constant 0 : index
    %33 = vector.load %arg1[%32, %c0_31] : memref<416x128xf32, #tpu.memory_space<vmem>>, vector<1x128xf32>
    %c6_32 = arith.constant 6 : index
    %c0_33 = arith.constant 0 : index
    %34 = vector.load %arg3[%c6_32, %c0_33] : memref<16x128xf32, #tpu.memory_space<vmem>>, vector<1x128xf32>
    tpu.vector_store %arg3[%c6_32, %c0_33], %33 {strides = array<i32>} : memref<16x128xf32, #tpu.memory_space<vmem>>, vector<1x128xf32>,
    %c7 = arith.constant 7 : index
    %c0_34 = arith.constant 0 : index
    %35 = memref.load %arg0[%c7, %c0_34] : memref<8x2xi32, #tpu.memory_space<smem>>
    %c0_i32_35 = arith.constant 0 : i32
    %36 = arith.addi %c0_i32_35, %35 : i32
    %37 = arith.index_cast %36 : i32 to index
    %c0_36 = arith.constant 0 : index
    %38 = vector.load %arg1[%37, %c0_36] : memref<416x128xf32, #tpu.memory_space<vmem>>, vector<1x128xf32>
    %c7_37 = arith.constant 7 : index
    %c0_38 = arith.constant 0 : index
    %39 = vector.load %arg3[%c7_37, %c0_38] : memref<16x128xf32, #tpu.memory_space<vmem>>, vector<1x128xf32>
    tpu.vector_store %arg3[%c7_37, %c0_38], %38 {strides = array<i32>} : memref<16x128xf32, #tpu.memory_space<vmem>>, vector<1x128xf32>,
    %c0_39 = arith.constant 0 : index
    %c1_40 = arith.constant 1 : index
    %40 = memref.load %arg0[%c0_39, %c1_40] : memref<8x2xi32, #tpu.memory_space<smem>>
    %c0_i32_41 = arith.constant 0 : i32
    %41 = arith.addi %c0_i32_41, %40 : i32
    %42 = arith.index_cast %41 : i32 to index
    %c0_42 = arith.constant 0 : index
    %43 = vector.load %arg1[%42, %c0_42] : memref<416x128xf32, #tpu.memory_space<vmem>>, vector<1x128xf32>
    %c8 = arith.constant 8 : index
    %c0_43 = arith.constant 0 : index
    %44 = vector.load %arg3[%c8, %c0_43] : memref<16x128xf32, #tpu.memory_space<vmem>>, vector<1x128xf32>
    tpu.vector_store %arg3[%c8, %c0_43], %43 {strides = array<i32>} : memref<16x128xf32, #tpu.memory_space<vmem>>, vector<1x128xf32>,
    %c1_44 = arith.constant 1 : index
    %c1_45 = arith.constant 1 : index
    %45 = memref.load %arg0[%c1_44, %c1_45] : memref<8x2xi32, #tpu.memory_space<smem>>
    %c0_i32_46 = arith.constant 0 : i32
    %46 = arith.addi %c0_i32_46, %45 : i32
    %47 = arith.index_cast %46 : i32 to index
    %c0_47 = arith.constant 0 : index
    %48 = vector.load %arg1[%47, %c0_47] : memref<416x128xf32, #tpu.memory_space<vmem>>, vector<1x128xf32>
    %c9 = arith.constant 9 : index
    %c0_48 = arith.constant 0 : index
    %49 = vector.load %arg3[%c9, %c0_48] : memref<16x128xf32, #tpu.memory_space<vmem>>, vector<1x128xf32>
    tpu.vector_store %arg3[%c9, %c0_48], %48 {strides = array<i32>} : memref<16x128xf32, #tpu.memory_space<vmem>>, vector<1x128xf32>,
    %c2_49 = arith.constant 2 : index
    %c1_50 = arith.constant 1 : index
    %50 = memref.load %arg0[%c2_49, %c1_50] : memref<8x2xi32, #tpu.memory_space<smem>>
    %c0_i32_51 = arith.constant 0 : i32
    %51 = arith.addi %c0_i32_51, %50 : i32
    %52 = arith.index_cast %51 : i32 to index
    %c0_52 = arith.constant 0 : index
    %53 = vector.load %arg1[%52, %c0_52] : memref<416x128xf32, #tpu.memory_space<vmem>>, vector<1x128xf32>
    %c10 = arith.constant 10 : index
    %c0_53 = arith.constant 0 : index
    %54 = vector.load %arg3[%c10, %c0_53] : memref<16x128xf32, #tpu.memory_space<vmem>>, vector<1x128xf32>
    tpu.vector_store %arg3[%c10, %c0_53], %53 {strides = array<i32>} : memref<16x128xf32, #tpu.memory_space<vmem>>, vector<1x128xf32>,
    %c3_54 = arith.constant 3 : index
    %c1_55 = arith.constant 1 : index
    %55 = memref.load %arg0[%c3_54, %c1_55] : memref<8x2xi32, #tpu.memory_space<smem>>
    %c0_i32_56 = arith.constant 0 : i32
    %56 = arith.addi %c0_i32_56, %55 : i32
    %57 = arith.index_cast %56 : i32 to index
    %c0_57 = arith.constant 0 : index
    %58 = vector.load %arg1[%57, %c0_57] : memref<416x128xf32, #tpu.memory_space<vmem>>, vector<1x128xf32>
    %c11 = arith.constant 11 : index
    %c0_58 = arith.constant 0 : index
    %59 = vector.load %arg3[%c11, %c0_58] : memref<16x128xf32, #tpu.memory_space<vmem>>, vector<1x128xf32>
    tpu.vector_store %arg3[%c11, %c0_58], %58 {strides = array<i32>} : memref<16x128xf32, #tpu.memory_space<vmem>>, vector<1x128xf32>,
    %c4_59 = arith.constant 4 : index
    %c1_60 = arith.constant 1 : index
    %60 = memref.load %arg0[%c4_59, %c1_60] : memref<8x2xi32, #tpu.memory_space<smem>>
    %c0_i32_61 = arith.constant 0 : i32
    %61 = arith.addi %c0_i32_61, %60 : i32
    %62 = arith.index_cast %61 : i32 to index
    %c0_62 = arith.constant 0 : index
    %63 = vector.load %arg1[%62, %c0_62] : memref<416x128xf32, #tpu.memory_space<vmem>>, vector<1x128xf32>
    %c12 = arith.constant 12 : index
    %c0_63 = arith.constant 0 : index
    %64 = vector.load %arg3[%c12, %c0_63] : memref<16x128xf32, #tpu.memory_space<vmem>>, vector<1x128xf32>
    tpu.vector_store %arg3[%c12, %c0_63], %63 {strides = array<i32>} : memref<16x128xf32, #tpu.memory_space<vmem>>, vector<1x128xf32>,
    %c5_64 = arith.constant 5 : index
    %c1_65 = arith.constant 1 : index
    %65 = memref.load %arg0[%c5_64, %c1_65] : memref<8x2xi32, #tpu.memory_space<smem>>
    %c0_i32_66 = arith.constant 0 : i32
    %66 = arith.addi %c0_i32_66, %65 : i32
    %67 = arith.index_cast %66 : i32 to index
    %c0_67 = arith.constant 0 : index
    %68 = vector.load %arg1[%67, %c0_67] : memref<416x128xf32, #tpu.memory_space<vmem>>, vector<1x128xf32>
    %c13 = arith.constant 13 : index
    %c0_68 = arith.constant 0 : index
    %69 = vector.load %arg3[%c13, %c0_68] : memref<16x128xf32, #tpu.memory_space<vmem>>, vector<1x128xf32>
    tpu.vector_store %arg3[%c13, %c0_68], %68 {strides = array<i32>} : memref<16x128xf32, #tpu.memory_space<vmem>>, vector<1x128xf32>,
    %c6_69 = arith.constant 6 : index
    %c1_70 = arith.constant 1 : index
    %70 = memref.load %arg0[%c6_69, %c1_70] : memref<8x2xi32, #tpu.memory_space<smem>>
    %c0_i32_71 = arith.constant 0 : i32
    %71 = arith.addi %c0_i32_71, %70 : i32
    %72 = arith.index_cast %71 : i32 to index
    %c0_72 = arith.constant 0 : index
    %73 = vector.load %arg1[%72, %c0_72] : memref<416x128xf32, #tpu.memory_space<vmem>>, vector<1x128xf32>
    %c14 = arith.constant 14 : index
    %c0_73 = arith.constant 0 : index
    %74 = vector.load %arg3[%c14, %c0_73] : memref<16x128xf32, #tpu.memory_space<vmem>>, vector<1x128xf32>
    tpu.vector_store %arg3[%c14, %c0_73], %73 {strides = array<i32>} : memref<16x128xf32, #tpu.memory_space<vmem>>, vector<1x128xf32>,
    %c7_74 = arith.constant 7 : index
    %c1_75 = arith.constant 1 : index
    %75 = memref.load %arg0[%c7_74, %c1_75] : memref<8x2xi32, #tpu.memory_space<smem>>
    %c0_i32_76 = arith.constant 0 : i32
    %76 = arith.addi %c0_i32_76, %75 : i32
    %77 = arith.index_cast %76 : i32 to index
    %c0_77 = arith.constant 0 : index
    %78 = vector.load %arg1[%77, %c0_77] : memref<416x128xf32, #tpu.memory_space<vmem>>, vector<1x128xf32>
    %c15 = arith.constant 15 : index
    %c0_78 = arith.constant 0 : index
    %79 = vector.load %arg3[%c15, %c0_78] : memref<16x128xf32, #tpu.memory_space<vmem>>, vector<1x128xf32>
    tpu.vector_store %arg3[%c15, %c0_78], %78 {strides = array<i32>} : memref<16x128xf32, #tpu.memory_space<vmem>>, vector<1x128xf32>,
    %c0_79 = arith.constant 0 : index
    %c0_80 = arith.constant 0 : index
    %80 = vector.load %arg3[%c0_79, %c0_80] : memref<16x128xf32, #tpu.memory_space<vmem>>, vector<16x128xf32>
    %c56 = arith.constant 56 : index
    %c0_81 = arith.constant 0 : index
    %81 = vector.load %arg1[%c56, %c0_81] : memref<416x128xf32, #tpu.memory_space<vmem>>, vector<16x128xf32>
    %82 = arith.addf %80, %81 : vector<16x128xf32>
    %83 = vector.extract_strided_slice %82 {offsets = [0, 0], sizes = [16, 32], strides = [1, 1]} : vector<16x128xf32> to vector<16x32xf32>
    %c72 = arith.constant 72 : index
    %c0_82 = arith.constant 0 : index
    %84 = vector.load %arg1[%c72, %c0_82] : memref<416x128xf32, #tpu.memory_space<vmem>>, vector<32x128xf32>
    %85 = vector.extract_strided_slice %84 {offsets = [0, 0], sizes = [32, 32], strides = [1, 1]} : vector<32x128xf32> to vector<32x32xf32>
    %86 = vector.extract_strided_slice %84 {offsets = [0, 32], sizes = [32, 32], strides = [1, 1]} : vector<32x128xf32> to vector<32x32xf32>
    %c104 = arith.constant 104 : index
    %c0_83 = arith.constant 0 : index
    %87 = vector.load %arg1[%c104, %c0_83] : memref<416x128xf32, #tpu.memory_space<vmem>>, vector<32x128xf32>
    %88 = vector.extract_strided_slice %87 {offsets = [0, 0], sizes = [32, 96], strides = [1, 1]} : vector<32x128xf32> to vector<32x96xf32>
    %89 = vector.extract_strided_slice %87 {offsets = [0, 96], sizes = [32, 32], strides = [1, 1]} : vector<32x128xf32> to vector<32x32xf32>
    %c136 = arith.constant 136 : index
    %c0_84 = arith.constant 0 : index
    %90 = vector.load %arg1[%c136, %c0_84] : memref<416x128xf32, #tpu.memory_space<vmem>>, vector<32x128xf32>
    %91 = vector.extract_strided_slice %90 {offsets = [0, 0], sizes = [32, 64], strides = [1, 1]} : vector<32x128xf32> to vector<32x64xf32>
    %c168 = arith.constant 168 : index
    %c0_85 = arith.constant 0 : index
    %92 = vector.load %arg1[%c168, %c0_85] : memref<416x128xf32, #tpu.memory_space<vmem>>, vector<64x128xf32>
    %93 = vector.extract_strided_slice %92 {offsets = [0, 0], sizes = [64, 32], strides = [1, 1]} : vector<64x128xf32> to vector<64x32xf32>
    %c392 = arith.constant 392 : index
    %c0_86 = arith.constant 0 : index
    %94 = vector.load %arg1[%c392, %c0_86] : memref<416x128xf32, #tpu.memory_space<vmem>>, vector<8x128xf32>
    %95 = vector.extract_strided_slice %94 {offsets = [0, 0], sizes = [1, 96], strides = [1, 1]} : vector<8x128xf32> to vector<1x96xf32>
    %96 = vector.extract_strided_slice %94 {offsets = [1, 0], sizes = [1, 32], strides = [1, 1]} : vector<8x128xf32> to vector<1x32xf32>
    %97 = vector.extract_strided_slice %94 {offsets = [2, 0], sizes = [1, 64], strides = [1, 1]} : vector<8x128xf32> to vector<1x64xf32>
    %98 = vector.extract_strided_slice %94 {offsets = [3, 0], sizes = [1, 32], strides = [1, 1]} : vector<8x128xf32> to vector<1x32xf32>
    %99 = vector.extract_strided_slice %94 {offsets = [4, 0], sizes = [1, 32], strides = [1, 1]} : vector<8x128xf32> to vector<1x32xf32>
    %100 = vector.extract_strided_slice %94 {offsets = [5, 0], sizes = [1, 32], strides = [1, 1]} : vector<8x128xf32> to vector<1x32xf32>
    %101 = vector.extract_strided_slice %94 {offsets = [6, 0], sizes = [1, 32], strides = [1, 1]} : vector<8x128xf32> to vector<1x32xf32>
    %102 = vector.extract_strided_slice %94 {offsets = [7, 0], sizes = [1, 32], strides = [1, 1]} : vector<8x128xf32> to vector<1x32xf32>
    %cst = arith.constant dense<0.000000e+00> : vector<16x96xf32>
    %103 = tpu.matmul %83, %88, %cst {dimension_numbers = #tpu.dot_dimension_numbers<[1], [0], [0], [1], [0, 0, 1, 1], [], []>} : vector<16x32xf32>, vector<32x96xf32>, vector<16x96xf32> -> vector<16x96xf32>
    %104 = vector.broadcast %95 : vector<1x96xf32> to vector<16x96xf32>
    %105 = arith.addf %103, %104 : vector<16x96xf32>
    %106 = vector.extract_strided_slice %105 {offsets = [0, 0], sizes = [8, 32], strides = [1, 1]} : vector<16x96xf32> to vector<8x32xf32>
    %107 = vector.extract_strided_slice %105 {offsets = [0, 32], sizes = [8, 32], strides = [1, 1]} : vector<16x96xf32> to vector<8x32xf32>
    %108 = vector.extract_strided_slice %105 {offsets = [0, 64], sizes = [8, 32], strides = [1, 1]} : vector<16x96xf32> to vector<8x32xf32>
    %109 = tpu.concatenate %107, %107, %107, %107 in 0 : vector<8x32xf32>, vector<8x32xf32>, vector<8x32xf32>, vector<8x32xf32> -> vector<32x32xf32>
    %110 = arith.mulf %109, %85 : vector<32x32xf32>
    %111 = tpu.concatenate %108, %108, %108, %108 in 0 : vector<8x32xf32>, vector<8x32xf32>, vector<8x32xf32>, vector<8x32xf32> -> vector<32x32xf32>
    %112 = arith.mulf %111, %85 : vector<32x32xf32>
    "tpu.trace_start"() <{level = 10 : i32, message = "qe,ke->qk"}> : () -> ()
    %cst_87 = arith.constant dense<0.000000e+00> : vector<8x32xf32>
    %113 = tpu.matmul %106, %110, %cst_87 {dimension_numbers = #tpu.dot_dimension_numbers<[1], [1], [0], [0], [0, 0, 1, 0], [], []>} : vector<8x32xf32>, vector<32x32xf32>, vector<8x32xf32> -> vector<8x32xf32>
    "tpu.trace_stop"() : () -> ()
    %cst_88 = arith.constant dense<0xFF800000> : vector<8xf32>
    %114 = vector.multi_reduction <maximumf>, %113, %cst_88 [1] : vector<8x32xf32> to vector<8xf32>
    %115 = vector.shape_cast %114 : vector<8xf32> to vector<8x1xf32>
    %116 = vector.broadcast %115 : vector<8x1xf32> to vector<8x32xf32>
    %117 = arith.subf %113, %116 : vector<8x32xf32>
    %118 = math.exp %117 : vector<8x32xf32>
    %cst_89 = arith.constant dense<0.000000e+00> : vector<8x32xf32>
    %119 = tpu.matmul %118, %86, %cst_89 {dimension_numbers = #tpu.dot_dimension_numbers<[1], [0], [0], [1], [0, 0, 1, 1], [], []>} : vector<8x32xf32>, vector<32x32xf32>, vector<8x32xf32> -> vector<8x32xf32>
    %120 = arith.divf %118, %119 : vector<8x32xf32>
    %cst_90 = arith.constant dense<0.000000e+00> : vector<8x32xf32>
    %121 = tpu.matmul %120, %112, %cst_90 {dimension_numbers = #tpu.dot_dimension_numbers<[1], [0], [0], [1], [0, 0, 1, 1], [], []>} : vector<8x32xf32>, vector<32x32xf32>, vector<8x32xf32> -> vector<8x32xf32>
    %122 = vector.extract_strided_slice %105 {offsets = [8, 0], sizes = [8, 32], strides = [1, 1]} : vector<16x96xf32> to vector<8x32xf32>
    %123 = vector.extract_strided_slice %105 {offsets = [8, 32], sizes = [8, 32], strides = [1, 1]} : vector<16x96xf32> to vector<8x32xf32>
    %124 = vector.extract_strided_slice %105 {offsets = [8, 64], sizes = [8, 32], strides = [1, 1]} : vector<16x96xf32> to vector<8x32xf32>
    %125 = tpu.concatenate %123, %123, %123, %123 in 0 : vector<8x32xf32>, vector<8x32xf32>, vector<8x32xf32>, vector<8x32xf32> -> vector<32x32xf32>
    %126 = arith.mulf %125, %85 : vector<32x32xf32>
    %127 = tpu.concatenate %124, %124, %124, %124 in 0 : vector<8x32xf32>, vector<8x32xf32>, vector<8x32xf32>, vector<8x32xf32> -> vector<32x32xf32>
    %128 = arith.mulf %127, %85 : vector<32x32xf32>
    "tpu.trace_start"() <{level = 10 : i32, message = "qe,ke->qk"}> : () -> ()
    %cst_91 = arith.constant dense<0.000000e+00> : vector<8x32xf32>
    %129 = tpu.matmul %122, %126, %cst_91 {dimension_numbers = #tpu.dot_dimension_numbers<[1], [1], [0], [0], [0, 0, 1, 0], [], []>} : vector<8x32xf32>, vector<32x32xf32>, vector<8x32xf32> -> vector<8x32xf32>
    "tpu.trace_stop"() : () -> ()
    %cst_92 = arith.constant dense<0xFF800000> : vector<8xf32>
    %130 = vector.multi_reduction <maximumf>, %129, %cst_92 [1] : vector<8x32xf32> to vector<8xf32>
    %131 = vector.shape_cast %130 : vector<8xf32> to vector<8x1xf32>
    %132 = vector.broadcast %131 : vector<8x1xf32> to vector<8x32xf32>
    %133 = arith.subf %129, %132 : vector<8x32xf32>
    %134 = math.exp %133 : vector<8x32xf32>
    %cst_93 = arith.constant dense<0.000000e+00> : vector<8x32xf32>
    %135 = tpu.matmul %134, %86, %cst_93 {dimension_numbers = #tpu.dot_dimension_numbers<[1], [0], [0], [1], [0, 0, 1, 1], [], []>} : vector<8x32xf32>, vector<32x32xf32>, vector<8x32xf32> -> vector<8x32xf32>
    %136 = arith.divf %134, %135 : vector<8x32xf32>
    %cst_94 = arith.constant dense<0.000000e+00> : vector<8x32xf32>
    %137 = tpu.matmul %136, %128, %cst_94 {dimension_numbers = #tpu.dot_dimension_numbers<[1], [0], [0], [1], [0, 0, 1, 1], [], []>} : vector<8x32xf32>, vector<32x32xf32>, vector<8x32xf32> -> vector<8x32xf32>
    %138 = tpu.concatenate %121, %137 in 0 : vector<8x32xf32>, vector<8x32xf32> -> vector<16x32xf32>
    %cst_95 = arith.constant dense<0.000000e+00> : vector<16x32xf32>
    %139 = tpu.matmul %138, %89, %cst_95 {dimension_numbers = #tpu.dot_dimension_numbers<[1], [0], [0], [1], [0, 0, 1, 1], [], []>} : vector<16x32xf32>, vector<32x32xf32>, vector<16x32xf32> -> vector<16x32xf32>
    %140 = vector.broadcast %96 : vector<1x32xf32> to vector<16x32xf32>
    %141 = arith.addf %139, %140 : vector<16x32xf32>
    %142 = arith.addf %83, %141 : vector<16x32xf32>
    %cst_96 = arith.constant dense<0.000000e+00> : vector<16xf32>
    %143 = vector.multi_reduction <add>, %142, %cst_96 [1] : vector<16x32xf32> to vector<16xf32>
    %144 = vector.shape_cast %143 : vector<16xf32> to vector<16x1xf32>
    %cst_97 = arith.constant 3.200000e+01 : f32
    %145 = vector.broadcast %cst_97 : f32 to vector<16x1xf32>
    %146 = arith.divf %144, %145 : vector<16x1xf32>
    %147 = vector.broadcast %146 : vector<16x1xf32> to vector<16x32xf32>
    %148 = arith.subf %142, %147 : vector<16x32xf32>
    %149 = arith.mulf %148, %148 : vector<16x32xf32>
    %cst_98 = arith.constant dense<0.000000e+00> : vector<16xf32>
    %150 = vector.multi_reduction <add>, %149, %cst_98 [1] : vector<16x32xf32> to vector<16xf32>
    %151 = vector.shape_cast %150 : vector<16xf32> to vector<16x1xf32>
    %cst_99 = arith.constant 3.200000e+01 : f32
    %152 = vector.broadcast %cst_99 : f32 to vector<16x1xf32>
    %153 = arith.divf %151, %152 : vector<16x1xf32>
    %154 = vector.broadcast %146 : vector<16x1xf32> to vector<16x32xf32>
    %155 = arith.subf %142, %154 : vector<16x32xf32>
    %cst_100 = arith.constant 9.99999974E-6 : f32
    %156 = vector.broadcast %cst_100 : f32 to vector<16x1xf32>
    %157 = arith.addf %153, %156 : vector<16x1xf32>
    %158 = math.rsqrt %157 : vector<16x1xf32>
    %159 = vector.broadcast %158 : vector<16x1xf32> to vector<16x32xf32>
    %160 = arith.mulf %155, %159 : vector<16x32xf32>
    %161 = vector.broadcast %99 : vector<1x32xf32> to vector<16x32xf32>
    %162 = arith.mulf %160, %161 : vector<16x32xf32>
    %163 = vector.broadcast %100 : vector<1x32xf32> to vector<16x32xf32>
    %164 = arith.addf %162, %163 : vector<16x32xf32>
    %cst_101 = arith.constant dense<0.000000e+00> : vector<16x64xf32>
    %165 = tpu.matmul %164, %91, %cst_101 {dimension_numbers = #tpu.dot_dimension_numbers<[1], [0], [0], [1], [0, 0, 1, 1], [], []>} : vector<16x32xf32>, vector<32x64xf32>, vector<16x64xf32> -> vector<16x64xf32>
    %166 = vector.broadcast %97 : vector<1x64xf32> to vector<16x64xf32>
    %167 = arith.addf %165, %166 : vector<16x64xf32>
    %cst_102 = arith.constant 0.000000e+00 : f32
    %168 = vector.broadcast %cst_102 : f32 to vector<16x64xf32>
    %169 = arith.maximumf %167, %168 : vector<16x64xf32>
    %cst_103 = arith.constant dense<0.000000e+00> : vector<16x32xf32>
    %170 = tpu.matmul %169, %93, %cst_103 {dimension_numbers = #tpu.dot_dimension_numbers<[1], [0], [0], [1], [0, 0, 1, 1], [], []>} : vector<16x64xf32>, vector<64x32xf32>, vector<16x32xf32> -> vector<16x32xf32>
    %171 = vector.broadcast %98 : vector<1x32xf32> to vector<16x32xf32>
    %172 = arith.addf %170, %171 : vector<16x32xf32>
    %173 = arith.addf %164, %172 : vector<16x32xf32>
    %cst_104 = arith.constant dense<0.000000e+00> : vector<16xf32>
    %174 = vector.multi_reduction <add>, %173, %cst_104 [1] : vector<16x32xf32> to vector<16xf32>
    %175 = vector.shape_cast %174 : vector<16xf32> to vector<16x1xf32>
    %cst_105 = arith.constant 3.200000e+01 : f32
    %176 = vector.broadcast %cst_105 : f32 to vector<16x1xf32>
    %177 = arith.divf %175, %176 : vector<16x1xf32>
    %178 = vector.broadcast %177 : vector<16x1xf32> to vector<16x32xf32>
    %179 = arith.subf %173, %178 : vector<16x32xf32>
    %180 = arith.mulf %179, %179 : vector<16x32xf32>
    %cst_106 = arith.constant dense<0.000000e+00> : vector<16xf32>
    %181 = vector.multi_reduction <add>, %180, %cst_106 [1] : vector<16x32xf32> to vector<16xf32>
    %182 = vector.shape_cast %181 : vector<16xf32> to vector<16x1xf32>
    %cst_107 = arith.constant 3.200000e+01 : f32
    %183 = vector.broadcast %cst_107 : f32 to vector<16x1xf32>
    %184 = arith.divf %182, %183 : vector<16x1xf32>
    %185 = vector.broadcast %177 : vector<16x1xf32> to vector<16x32xf32>
    %186 = arith.subf %173, %185 : vector<16x32xf32>
    %cst_108 = arith.constant 9.99999974E-6 : f32
    %187 = vector.broadcast %cst_108 : f32 to vector<16x1xf32>
    %188 = arith.addf %184, %187 : vector<16x1xf32>
    %189 = math.rsqrt %188 : vector<16x1xf32>
    %190 = vector.broadcast %189 : vector<16x1xf32> to vector<16x32xf32>
    %191 = arith.mulf %186, %190 : vector<16x32xf32>
    %192 = vector.broadcast %101 : vector<1x32xf32> to vector<16x32xf32>
    %193 = arith.mulf %191, %192 : vector<16x32xf32>
    %194 = vector.broadcast %102 : vector<1x32xf32> to vector<16x32xf32>
    %195 = arith.addf %193, %194 : vector<16x32xf32>
    %c232 = arith.constant 232 : index
    %c0_109 = arith.constant 0 : index
    %196 = vector.load %arg1[%c232, %c0_109] : memref<416x128xf32, #tpu.memory_space<vmem>>, vector<32x128xf32>
    %197 = vector.extract_strided_slice %196 {offsets = [0, 0], sizes = [32, 96], strides = [1, 1]} : vector<32x128xf32> to vector<32x96xf32>
    %198 = vector.extract_strided_slice %196 {offsets = [0, 96], sizes = [32, 32], strides = [1, 1]} : vector<32x128xf32> to vector<32x32xf32>
    %c264 = arith.constant 264 : index
    %c0_110 = arith.constant 0 : index
    %199 = vector.load %arg1[%c264, %c0_110] : memref<416x128xf32, #tpu.memory_space<vmem>>, vector<32x128xf32>
    %200 = vector.extract_strided_slice %199 {offsets = [0, 0], sizes = [32, 64], strides = [1, 1]} : vector<32x128xf32> to vector<32x64xf32>
    %c296 = arith.constant 296 : index
    %c0_111 = arith.constant 0 : index
    %201 = vector.load %arg1[%c296, %c0_111] : memref<416x128xf32, #tpu.memory_space<vmem>>, vector<64x128xf32>
    %202 = vector.extract_strided_slice %201 {offsets = [0, 0], sizes = [64, 32], strides = [1, 1]} : vector<64x128xf32> to vector<64x32xf32>
    %c400 = arith.constant 400 : index
    %c0_112 = arith.constant 0 : index
    %203 = vector.load %arg1[%c400, %c0_112] : memref<416x128xf32, #tpu.memory_space<vmem>>, vector<8x128xf32>
    %204 = vector.extract_strided_slice %203 {offsets = [0, 0], sizes = [1, 96], strides = [1, 1]} : vector<8x128xf32> to vector<1x96xf32>
    %205 = vector.extract_strided_slice %203 {offsets = [1, 0], sizes = [1, 32], strides = [1, 1]} : vector<8x128xf32> to vector<1x32xf32>
    %206 = vector.extract_strided_slice %203 {offsets = [2, 0], sizes = [1, 64], strides = [1, 1]} : vector<8x128xf32> to vector<1x64xf32>
    %207 = vector.extract_strided_slice %203 {offsets = [3, 0], sizes = [1, 32], strides = [1, 1]} : vector<8x128xf32> to vector<1x32xf32>
    %208 = vector.extract_strided_slice %203 {offsets = [4, 0], sizes = [1, 32], strides = [1, 1]} : vector<8x128xf32> to vector<1x32xf32>
    %209 = vector.extract_strided_slice %203 {offsets = [5, 0], sizes = [1, 32], strides = [1, 1]} : vector<8x128xf32> to vector<1x32xf32>
    %210 = vector.extract_strided_slice %203 {offsets = [6, 0], sizes = [1, 32], strides = [1, 1]} : vector<8x128xf32> to vector<1x32xf32>
    %211 = vector.extract_strided_slice %203 {offsets = [7, 0], sizes = [1, 32], strides = [1, 1]} : vector<8x128xf32> to vector<1x32xf32>
    %cst_113 = arith.constant dense<0.000000e+00> : vector<16x96xf32>
    %212 = tpu.matmul %195, %197, %cst_113 {dimension_numbers = #tpu.dot_dimension_numbers<[1], [0], [0], [1], [0, 0, 1, 1], [], []>} : vector<16x32xf32>, vector<32x96xf32>, vector<16x96xf32> -> vector<16x96xf32>
    %213 = vector.broadcast %204 : vector<1x96xf32> to vector<16x96xf32>
    %214 = arith.addf %212, %213 : vector<16x96xf32>
    %215 = vector.extract_strided_slice %214 {offsets = [0, 0], sizes = [8, 32], strides = [1, 1]} : vector<16x96xf32> to vector<8x32xf32>
    %216 = vector.extract_strided_slice %214 {offsets = [0, 32], sizes = [8, 32], strides = [1, 1]} : vector<16x96xf32> to vector<8x32xf32>
    %217 = vector.extract_strided_slice %214 {offsets = [0, 64], sizes = [8, 32], strides = [1, 1]} : vector<16x96xf32> to vector<8x32xf32>
    %218 = tpu.concatenate %216, %216, %216, %216 in 0 : vector<8x32xf32>, vector<8x32xf32>, vector<8x32xf32>, vector<8x32xf32> -> vector<32x32xf32>
    %219 = arith.mulf %218, %85 : vector<32x32xf32>
    %220 = tpu.concatenate %217, %217, %217, %217 in 0 : vector<8x32xf32>, vector<8x32xf32>, vector<8x32xf32>, vector<8x32xf32> -> vector<32x32xf32>
    %221 = arith.mulf %220, %85 : vector<32x32xf32>
    "tpu.trace_start"() <{level = 10 : i32, message = "qe,ke->qk"}> : () -> ()
    %cst_114 = arith.constant dense<0.000000e+00> : vector<8x32xf32>
    %222 = tpu.matmul %215, %219, %cst_114 {dimension_numbers = #tpu.dot_dimension_numbers<[1], [1], [0], [0], [0, 0, 1, 0], [], []>} : vector<8x32xf32>, vector<32x32xf32>, vector<8x32xf32> -> vector<8x32xf32>
    "tpu.trace_stop"() : () -> ()
    %cst_115 = arith.constant dense<0xFF800000> : vector<8xf32>
    %223 = vector.multi_reduction <maximumf>, %222, %cst_115 [1] : vector<8x32xf32> to vector<8xf32>
    %224 = vector.shape_cast %223 : vector<8xf32> to vector<8x1xf32>
    %225 = vector.broadcast %224 : vector<8x1xf32> to vector<8x32xf32>
    %226 = arith.subf %222, %225 : vector<8x32xf32>
    %227 = math.exp %226 : vector<8x32xf32>
    %cst_116 = arith.constant dense<0.000000e+00> : vector<8x32xf32>
    %228 = tpu.matmul %227, %86, %cst_116 {dimension_numbers = #tpu.dot_dimension_numbers<[1], [0], [0], [1], [0, 0, 1, 1], [], []>} : vector<8x32xf32>, vector<32x32xf32>, vector<8x32xf32> -> vector<8x32xf32>
    %229 = arith.divf %227, %228 : vector<8x32xf32>
    %cst_117 = arith.constant dense<0.000000e+00> : vector<8x32xf32>
    %230 = tpu.matmul %229, %221, %cst_117 {dimension_numbers = #tpu.dot_dimension_numbers<[1], [0], [0], [1], [0, 0, 1, 1], [], []>} : vector<8x32xf32>, vector<32x32xf32>, vector<8x32xf32> -> vector<8x32xf32>
    %231 = vector.extract_strided_slice %214 {offsets = [8, 0], sizes = [8, 32], strides = [1, 1]} : vector<16x96xf32> to vector<8x32xf32>
    %232 = vector.extract_strided_slice %214 {offsets = [8, 32], sizes = [8, 32], strides = [1, 1]} : vector<16x96xf32> to vector<8x32xf32>
    %233 = vector.extract_strided_slice %214 {offsets = [8, 64], sizes = [8, 32], strides = [1, 1]} : vector<16x96xf32> to vector<8x32xf32>
    %234 = tpu.concatenate %232, %232, %232, %232 in 0 : vector<8x32xf32>, vector<8x32xf32>, vector<8x32xf32>, vector<8x32xf32> -> vector<32x32xf32>
    %235 = arith.mulf %234, %85 : vector<32x32xf32>
    %236 = tpu.concatenate %233, %233, %233, %233 in 0 : vector<8x32xf32>, vector<8x32xf32>, vector<8x32xf32>, vector<8x32xf32> -> vector<32x32xf32>
    %237 = arith.mulf %236, %85 : vector<32x32xf32>
    "tpu.trace_start"() <{level = 10 : i32, message = "qe,ke->qk"}> : () -> ()
    %cst_118 = arith.constant dense<0.000000e+00> : vector<8x32xf32>
    %238 = tpu.matmul %231, %235, %cst_118 {dimension_numbers = #tpu.dot_dimension_numbers<[1], [1], [0], [0], [0, 0, 1, 0], [], []>} : vector<8x32xf32>, vector<32x32xf32>, vector<8x32xf32> -> vector<8x32xf32>
    "tpu.trace_stop"() : () -> ()
    %cst_119 = arith.constant dense<0xFF800000> : vector<8xf32>
    %239 = vector.multi_reduction <maximumf>, %238, %cst_119 [1] : vector<8x32xf32> to vector<8xf32>
    %240 = vector.shape_cast %239 : vector<8xf32> to vector<8x1xf32>
    %241 = vector.broadcast %240 : vector<8x1xf32> to vector<8x32xf32>
    %242 = arith.subf %238, %241 : vector<8x32xf32>
    %243 = math.exp %242 : vector<8x32xf32>
    %cst_120 = arith.constant dense<0.000000e+00> : vector<8x32xf32>
    %244 = tpu.matmul %243, %86, %cst_120 {dimension_numbers = #tpu.dot_dimension_numbers<[1], [0], [0], [1], [0, 0, 1, 1], [], []>} : vector<8x32xf32>, vector<32x32xf32>, vector<8x32xf32> -> vector<8x32xf32>
    %245 = arith.divf %243, %244 : vector<8x32xf32>
    %cst_121 = arith.constant dense<0.000000e+00> : vector<8x32xf32>
    %246 = tpu.matmul %245, %237, %cst_121 {dimension_numbers = #tpu.dot_dimension_numbers<[1], [0], [0], [1], [0, 0, 1, 1], [], []>} : vector<8x32xf32>, vector<32x32xf32>, vector<8x32xf32> -> vector<8x32xf32>
    %247 = tpu.concatenate %230, %246 in 0 : vector<8x32xf32>, vector<8x32xf32> -> vector<16x32xf32>
    %cst_122 = arith.constant dense<0.000000e+00> : vector<16x32xf32>
    %248 = tpu.matmul %247, %198, %cst_122 {dimension_numbers = #tpu.dot_dimension_numbers<[1], [0], [0], [1], [0, 0, 1, 1], [], []>} : vector<16x32xf32>, vector<32x32xf32>, vector<16x32xf32> -> vector<16x32xf32>
    %249 = vector.broadcast %205 : vector<1x32xf32> to vector<16x32xf32>
    %250 = arith.addf %248, %249 : vector<16x32xf32>
    %251 = arith.addf %195, %250 : vector<16x32xf32>
    %cst_123 = arith.constant dense<0.000000e+00> : vector<16xf32>
    %252 = vector.multi_reduction <add>, %251, %cst_123 [1] : vector<16x32xf32> to vector<16xf32>
    %253 = vector.shape_cast %252 : vector<16xf32> to vector<16x1xf32>
    %cst_124 = arith.constant 3.200000e+01 : f32
    %254 = vector.broadcast %cst_124 : f32 to vector<16x1xf32>
    %255 = arith.divf %253, %254 : vector<16x1xf32>
    %256 = vector.broadcast %255 : vector<16x1xf32> to vector<16x32xf32>
    %257 = arith.subf %251, %256 : vector<16x32xf32>
    %258 = arith.mulf %257, %257 : vector<16x32xf32>
    %cst_125 = arith.constant dense<0.000000e+00> : vector<16xf32>
    %259 = vector.multi_reduction <add>, %258, %cst_125 [1] : vector<16x32xf32> to vector<16xf32>
    %260 = vector.shape_cast %259 : vector<16xf32> to vector<16x1xf32>
    %cst_126 = arith.constant 3.200000e+01 : f32
    %261 = vector.broadcast %cst_126 : f32 to vector<16x1xf32>
    %262 = arith.divf %260, %261 : vector<16x1xf32>
    %263 = vector.broadcast %255 : vector<16x1xf32> to vector<16x32xf32>
    %264 = arith.subf %251, %263 : vector<16x32xf32>
    %cst_127 = arith.constant 9.99999974E-6 : f32
    %265 = vector.broadcast %cst_127 : f32 to vector<16x1xf32>
    %266 = arith.addf %262, %265 : vector<16x1xf32>
    %267 = math.rsqrt %266 : vector<16x1xf32>
    %268 = vector.broadcast %267 : vector<16x1xf32> to vector<16x32xf32>
    %269 = arith.mulf %264, %268 : vector<16x32xf32>
    %270 = vector.broadcast %208 : vector<1x32xf32> to vector<16x32xf32>
    %271 = arith.mulf %269, %270 : vector<16x32xf32>
    %272 = vector.broadcast %209 : vector<1x32xf32> to vector<16x32xf32>
    %273 = arith.addf %271, %272 : vector<16x32xf32>
    %cst_128 = arith.constant dense<0.000000e+00> : vector<16x64xf32>
    %274 = tpu.matmul %273, %200, %cst_128 {dimension_numbers = #tpu.dot_dimension_numbers<[1], [0], [0], [1], [0, 0, 1, 1], [], []>} : vector<16x32xf32>, vector<32x64xf32>, vector<16x64xf32> -> vector<16x64xf32>
    %275 = vector.broadcast %206 : vector<1x64xf32> to vector<16x64xf32>
    %276 = arith.addf %274, %275 : vector<16x64xf32>
    %cst_129 = arith.constant 0.000000e+00 : f32
    %277 = vector.broadcast %cst_129 : f32 to vector<16x64xf32>
    %278 = arith.maximumf %276, %277 : vector<16x64xf32>
    %cst_130 = arith.constant dense<0.000000e+00> : vector<16x32xf32>
    %279 = tpu.matmul %278, %202, %cst_130 {dimension_numbers = #tpu.dot_dimension_numbers<[1], [0], [0], [1], [0, 0, 1, 1], [], []>} : vector<16x64xf32>, vector<64x32xf32>, vector<16x32xf32> -> vector<16x32xf32>
    %280 = vector.broadcast %207 : vector<1x32xf32> to vector<16x32xf32>
    %281 = arith.addf %279, %280 : vector<16x32xf32>
    %282 = arith.addf %273, %281 : vector<16x32xf32>
    %cst_131 = arith.constant dense<0.000000e+00> : vector<16xf32>
    %283 = vector.multi_reduction <add>, %282, %cst_131 [1] : vector<16x32xf32> to vector<16xf32>
    %284 = vector.shape_cast %283 : vector<16xf32> to vector<16x1xf32>
    %cst_132 = arith.constant 3.200000e+01 : f32
    %285 = vector.broadcast %cst_132 : f32 to vector<16x1xf32>
    %286 = arith.divf %284, %285 : vector<16x1xf32>
    %287 = vector.broadcast %286 : vector<16x1xf32> to vector<16x32xf32>
    %288 = arith.subf %282, %287 : vector<16x32xf32>
    %289 = arith.mulf %288, %288 : vector<16x32xf32>
    %cst_133 = arith.constant dense<0.000000e+00> : vector<16xf32>
    %290 = vector.multi_reduction <add>, %289, %cst_133 [1] : vector<16x32xf32> to vector<16xf32>
    %291 = vector.shape_cast %290 : vector<16xf32> to vector<16x1xf32>
    %cst_134 = arith.constant 3.200000e+01 : f32
    %292 = vector.broadcast %cst_134 : f32 to vector<16x1xf32>
    %293 = arith.divf %291, %292 : vector<16x1xf32>
    %294 = vector.broadcast %286 : vector<16x1xf32> to vector<16x32xf32>
    %295 = arith.subf %282, %294 : vector<16x32xf32>
    %cst_135 = arith.constant 9.99999974E-6 : f32
    %296 = vector.broadcast %cst_135 : f32 to vector<16x1xf32>
    %297 = arith.addf %293, %296 : vector<16x1xf32>
    %298 = math.rsqrt %297 : vector<16x1xf32>
    %299 = vector.broadcast %298 : vector<16x1xf32> to vector<16x32xf32>
    %300 = arith.mulf %295, %299 : vector<16x32xf32>
    %301 = vector.broadcast %210 : vector<1x32xf32> to vector<16x32xf32>
    %302 = arith.mulf %300, %301 : vector<16x32xf32>
    %303 = vector.broadcast %211 : vector<1x32xf32> to vector<16x32xf32>
    %304 = arith.addf %302, %303 : vector<16x32xf32>
    %c408 = arith.constant 408 : index
    %c0_136 = arith.constant 0 : index
    %305 = vector.load %arg1[%c408, %c0_136] : memref<416x128xf32, #tpu.memory_space<vmem>>, vector<8x128xf32>
    %306 = vector.extract_strided_slice %305 {offsets = [0, 0], sizes = [1, 32], strides = [1, 1]} : vector<8x128xf32> to vector<1x32xf32>
    %307 = vector.extract_strided_slice %305 {offsets = [1, 0], sizes = [1, 32], strides = [1, 1]} : vector<8x128xf32> to vector<1x32xf32>
    %308 = vector.extract_strided_slice %305 {offsets = [2, 0], sizes = [1, 128], strides = [1, 1]} : vector<8x128xf32> to vector<1x128xf32>
    %cst_137 = arith.constant dense<0.000000e+00> : vector<16xf32>
    %309 = vector.multi_reduction <add>, %304, %cst_137 [1] : vector<16x32xf32> to vector<16xf32>
    %310 = vector.shape_cast %309 : vector<16xf32> to vector<16x1xf32>
    %cst_138 = arith.constant 3.200000e+01 : f32
    %311 = vector.broadcast %cst_138 : f32 to vector<16x1xf32>
    %312 = arith.divf %310, %311 : vector<16x1xf32>
    %313 = vector.broadcast %312 : vector<16x1xf32> to vector<16x32xf32>
    %314 = arith.subf %304, %313 : vector<16x32xf32>
    %315 = arith.mulf %314, %314 : vector<16x32xf32>
    %cst_139 = arith.constant dense<0.000000e+00> : vector<16xf32>
    %316 = vector.multi_reduction <add>, %315, %cst_139 [1] : vector<16x32xf32> to vector<16xf32>
    %317 = vector.shape_cast %316 : vector<16xf32> to vector<16x1xf32>
    %cst_140 = arith.constant 3.200000e+01 : f32
    %318 = vector.broadcast %cst_140 : f32 to vector<16x1xf32>
    %319 = arith.divf %317, %318 : vector<16x1xf32>
    %320 = vector.broadcast %312 : vector<16x1xf32> to vector<16x32xf32>
    %321 = arith.subf %304, %320 : vector<16x32xf32>
    %cst_141 = arith.constant 9.99999974E-6 : f32
    %322 = vector.broadcast %cst_141 : f32 to vector<16x1xf32>
    %323 = arith.addf %319, %322 : vector<16x1xf32>
    %324 = math.rsqrt %323 : vector<16x1xf32>
    %325 = vector.broadcast %324 : vector<16x1xf32> to vector<16x32xf32>
    %326 = arith.mulf %321, %325 : vector<16x32xf32>
    %327 = vector.broadcast %306 : vector<1x32xf32> to vector<16x32xf32>
    %328 = arith.mulf %326, %327 : vector<16x32xf32>
    %329 = vector.broadcast %307 : vector<1x32xf32> to vector<16x32xf32>
    %330 = arith.addf %328, %329 : vector<16x32xf32>
    %331 = vector.shape_cast %330 : vector<16x32xf32> to vector<2x8x32xf32>
    %cst_142 = arith.constant dense<0.000000e+00> : vector<2x32xf32>
    %332 = vector.multi_reduction <add>, %331, %cst_142 [1] : vector<2x8x32xf32> to vector<2x32xf32>
    %cst_143 = arith.constant 8.000000e+00 : f32
    %333 = vector.broadcast %cst_143 : f32 to vector<2x32xf32>
    %334 = arith.divf %332, %333 : vector<2x32xf32>
    %c360 = arith.constant 360 : index
    %c0_144 = arith.constant 0 : index
    %335 = vector.load %arg1[%c360, %c0_144] : memref<416x128xf32, #tpu.memory_space<vmem>>, vector<32x128xf32>
    %cst_145 = arith.constant dense<0.000000e+00> : vector<2x128xf32>
    %336 = tpu.matmul %334, %335, %cst_145 {dimension_numbers = #tpu.dot_dimension_numbers<[1], [0], [0], [1], [0, 0, 1, 1], [], []>} : vector<2x32xf32>, vector<32x128xf32>, vector<2x128xf32> -> vector<2x128xf32>
    %337 = vector.broadcast %308 : vector<1x128xf32> to vector<2x128xf32>
    %338 = arith.addf %336, %337 : vector<2x128xf32>
    %c0_146 = arith.constant 0 : index
    %c0_147 = arith.constant 0 : index
    %339 = vector.load %arg2[%c0_146, %c0_147] : memref<2x128xf32, #tpu.memory_space<vmem>>, vector<2x128xf32>
    tpu.vector_store %arg2[%c0_146, %c0_147], %338 {strides = array<i32>} : memref<2x128xf32, #tpu.memory_space<vmem>>, vector<2x128xf32>,
    return
  }
}

</mosaic_0001>

<llo_original>
// kernel: transformer_encoder_only_forward.1
$region0: #{transformer_encoder_only_forward.1}
  #allocation0 [shape = 'u32[]', space=smem, size = 0x4, offset = 0x4, fixed_abs, tag = 'smem constant byte address 0x4 - core index']
  #allocation1 [shape = 'u32[144,128]{1,0:T(1,128)}', space=vmem, size = 0x12000, scoped, tag = 'internal scratch']
  #allocation2 [shape = 'f32[16,128]{1,0:T(8,128)}', space=vmem, size = 0x2000, scoped, tag = 'scratch operand']
  %s0 = inlined_call_operand.vmem [shape: s32[8,2], index: 0, kind: input, shape index: {}]
  %s1 = inlined_call_operand.hbm [shape: f32[416,128], index: 1, kind: input, shape index: {}]
  %s2 = inlined_call_operand.hbm [shape: f32[2,128], index: 2, kind: output, shape index: {}]
  %s3 = sld [smem:[#allocation0]]
  $region26: #{transformer_encoder_only_forward.1} parent=0
    _
  %s5 = ssub.s32 1, %s3
  %s6 = scalar_select 0, %s5, %s3
  $region1: #{transformer_encoder_only_forward.1} parent=0
    #allocation3 [shape = 'u8[4096]{0}', space=smem, size = 0x1000, scoped, tag = 'input window, operand 0, single buffered']
    #allocation4 [shape = 's32[1]{0}', space=sflag, size = 0x4, scoped, tag = 'scoped memory for transformer_encoder_only_forward.1']
    #allocation5 [shape = 's32[1]{0}', space=sflag, size = 0x4, scoped, tag = 'scoped memory for transformer_encoder_only_forward.1']
    #allocation6 [shape = 's32[1]{0}', space=sflag, size = 0x4, scoped, tag = 'scoped memory for transformer_encoder_only_forward.1']
    #allocation7 [shape = 'u8[212992]{0}', space=vmem, size = 0x34000, scoped, tag = 'input window, operand 1, single buffered']
    #allocation8 [shape = 'u8[1024]{0}', space=vmem, size = 0x400, scoped, tag = 'output window, operand 0, single buffered']
    %7 = vsyncpa [#allocation6], 0
    %8 = vsyncpa [#allocation4], 0
    %9 = vsyncpa [#allocation5], 0
    // Predicated region
    $region2: #{transformer_encoder_only_forward.1} parent=1 // pred_check
      _
    $region3: #{transformer_encoder_only_forward.1} parent=1 // pred_check_branch
      %11 = sbr.rel (0) target = $region5
    $region4: #{transformer_encoder_only_forward.1} parent=1 // pred_region
      %s13 = ssub.s32 128, 128
      %14 = vsyncadd [#allocation6], %s13
      %s16 = sshll.u32 %s0, 4
      %s17 = int_to_ptr.vmem [resolvable:$true] %s16
      %19 = dma.vmem_to_smem %s17, 128, [#allocation3], [#allocation6]
    $region5: #{transformer_encoder_only_forward.1} parent=1 // pred_fallthru
      _
    // Predicated region
    $region6: #{transformer_encoder_only_forward.1} parent=1 // pred_check
      _
    $region7: #{transformer_encoder_only_forward.1} parent=1 // pred_check_branch
      %21 = sbr.rel (0) target = $region9
    $region8: #{transformer_encoder_only_forward.1} parent=1 // pred_region
      %s23 = ssub.s32 6656, 6656
      %24 = vsyncadd [#allocation4], %s23
      %s25 = sshll.u32 [#allocation7], 4
      %s26 = int_to_ptr.vmem [resolvable:$true] %s25
      %31 = dma.hbm_to_vmem [thread:$0]  %s1, 6656, %s26, [#allocation4], 128, 128, 8
    $region9: #{transformer_encoder_only_forward.1} parent=1 // pred_fallthru
      _
    // Predicated region
    $region10: #{transformer_encoder_only_forward.1} parent=1 // pred_check
      _
    $region11: #{transformer_encoder_only_forward.1} parent=1 // pred_check_branch
      %33 = sbr.rel (0) target = $region13
    $region12: #{transformer_encoder_only_forward.1} parent=1 // pred_region
      %34 = dma.done [#allocation6], 128
    $region13: #{transformer_encoder_only_forward.1} parent=1 // pred_fallthru
      _
    // Predicated region
    $region14: #{transformer_encoder_only_forward.1} parent=1 // pred_check
      _
    $region15: #{transformer_encoder_only_forward.1} parent=1 // pred_check_branch
      %36 = sbr.rel (0) target = $region17
    $region16: #{transformer_encoder_only_forward.1} parent=1 // pred_region
      %37 = dma.done [#allocation4], 6656
    $region17: #{transformer_encoder_only_forward.1} parent=1 // pred_fallthru
      _
    %38 = sfence
    %s39 = sld [smem:[#allocation3]]
    %s40 = scalar_lea.vmem [#allocation7], %s39
    %v41 = vld [vmem:[%s40] sm:$0x1]
    %42 = vst [vmem:[#allocation2] sm:$0x1] %v41
    %s43 = sld [smem:[#allocation3 + $0x80]]
    %s44 = scalar_lea.vmem [#allocation7], %s43
    %v45 = vld [vmem:[%s44] sm:$0x1]
    %46 = vst [vmem:[#allocation2 + $0x1] sm:$0x1] %v45
    %s47 = sld [smem:[#allocation3 + $0x100]]
    %s48 = scalar_lea.vmem [#allocation7], %s47
    %v49 = vld [vmem:[%s48] sm:$0x1]
    %50 = vst [vmem:[#allocation2 + $0x2] sm:$0x1] %v49
    %s51 = sld [smem:[#allocation3 + $0x180]]
    %s52 = scalar_lea.vmem [#allocation7], %s51
    %v53 = vld [vmem:[%s52] sm:$0x1]
    %54 = vst [vmem:[#allocation2 + $0x3] sm:$0x1] %v53
    %s55 = sld [smem:[#allocation3 + $0x200]]
    %s56 = scalar_lea.vmem [#allocation7], %s55
    %v57 = vld [vmem:[%s56] sm:$0x1]
    %58 = vst [vmem:[#allocation2 + $0x4] sm:$0x1] %v57
    %s59 = sld [smem:[#allocation3 + $0x280]]
    %s60 = scalar_lea.vmem [#allocation7], %s59
    %v61 = vld [vmem:[%s60] sm:$0x1]
    %62 = vst [vmem:[#allocation2 + $0x5] sm:$0x1] %v61
    %s63 = sld [smem:[#allocation3 + $0x300]]
    %s64 = scalar_lea.vmem [#allocation7], %s63
    %v65 = vld [vmem:[%s64] sm:$0x1]
    %66 = vst [vmem:[#allocation2 + $0x6] sm:$0x1] %v65
    %s67 = sld [smem:[#allocation3 + $0x380]]
    %s68 = scalar_lea.vmem [#allocation7], %s67
    %v69 = vld [vmem:[%s68] sm:$0x1]
    %70 = vst [vmem:[#allocation2 + $0x7] sm:$0x1] %v69
    %s71 = sld [smem:[#allocation3 + $0x1]]
    %s72 = scalar_lea.vmem [#allocation7], %s71
    %v73 = vld [vmem:[%s72] sm:$0x1]
    %74 = vst [vmem:[#allocation2 + $0x8] sm:$0x1] %v73
    %s75 = sld [smem:[#allocation3 + $0x81]]
    %s76 = scalar_lea.vmem [#allocation7], %s75
    %v77 = vld [vmem:[%s76] sm:$0x1]
    %78 = vst [vmem:[#allocation2 + $0x9] sm:$0x1] %v77
    %s79 = sld [smem:[#allocation3 + $0x101]]
    %s80 = scalar_lea.vmem [#allocation7], %s79
    %v81 = vld [vmem:[%s80] sm:$0x1]
    %82 = vst [vmem:[#allocation2 + $0xa] sm:$0x1] %v81
    %s83 = sld [smem:[#allocation3 + $0x181]]
    %s84 = scalar_lea.vmem [#allocation7], %s83
    %v85 = vld [vmem:[%s84] sm:$0x1]
    %86 = vst [vmem:[#allocation2 + $0xb] sm:$0x1] %v85
    %s87 = sld [smem:[#allocation3 + $0x201]]
    %s88 = scalar_lea.vmem [#allocation7], %s87
    %v89 = vld [vmem:[%s88] sm:$0x1]
    %90 = vst [vmem:[#allocation2 + $0xc] sm:$0x1] %v89
    %s91 = sld [smem:[#allocation3 + $0x281]]
    %s92 = scalar_lea.vmem [#allocation7], %s91
    %v93 = vld [vmem:[%s92] sm:$0x1]
    %94 = vst [vmem:[#allocation2 + $0xd] sm:$0x1] %v93
    %s95 = sld [smem:[#allocation3 + $0x301]]
    %s96 = scalar_lea.vmem [#allocation7], %s95
    %v97 = vld [vmem:[%s96] sm:$0x1]
    %98 = vst [vmem:[#allocation2 + $0xe] sm:$0x1] %v97
    %s99 = sld [smem:[#allocation3 + $0x381]]
    %s100 = scalar_lea.vmem [#allocation7], %s99
    %v101 = vld [vmem:[%s100] sm:$0x1]
    %102 = vst [vmem:[#allocation2 + $0xf] sm:$0x1] %v101
    %v103 = vld [vmem:[#allocation2] sm:$0xff]
    %v104 = vld [vmem:[#allocation2 + $0x8] sm:$0xff]
    %v105 = vld [vmem:[#allocation7 + $0x38] sm:$0xff]
    %v106 = vld [vmem:[#allocation7 + $0x40] sm:$0xff]
    %v107 = vadd.f32 %v103, %v105
    %v108 = vadd.f32 %v104, %v106
    %v109 = vld [vmem:[#allocation7 + $0x48] sm:$0xff]
    %v110 = vld [vmem:[#allocation7 + $0x50] sm:$0xff]
    %v111 = vld [vmem:[#allocation7 + $0x58] sm:$0xff]
    %v112 = vld [vmem:[#allocation7 + $0x60] sm:$0xff]
    %v113 = vld [vmem:[#allocation7 + $0x68] sm:$0xff]
    %v114 = vld [vmem:[#allocation7 + $0x70] sm:$0xff]
    %v115 = vld [vmem:[#allocation7 + $0x78] sm:$0xff]
    %v116 = vld [vmem:[#allocation7 + $0x80] sm:$0xff]
    %v117 = vld [vmem:[#allocation7 + $0x88] sm:$0xff]
    %v118 = vld [vmem:[#allocation7 + $0x90] sm:$0xff]
    %v119 = vld [vmem:[#allocation7 + $0x98] sm:$0xff]
    %v120 = vld [vmem:[#allocation7 + $0xa0] sm:$0xff]
    %v121 = vld [vmem:[#allocation7 + $0xa8] sm:$0xff]
    %v122 = vld [vmem:[#allocation7 + $0xb0] sm:$0xff]
    %v123 = vld [vmem:[#allocation7 + $0xb8] sm:$0xff]
    %v124 = vld [vmem:[#allocation7 + $0xc0] sm:$0xff]
    %v125 = vld [vmem:[#allocation7 + $0xc8] sm:$0xff]
    %v126 = vld [vmem:[#allocation7 + $0xd0] sm:$0xff]
    %v127 = vld [vmem:[#allocation7 + $0xd8] sm:$0xff]
    %v128 = vld [vmem:[#allocation7 + $0xe0] sm:$0xff]
    %v129 = vld [vmem:[#allocation7 + $0x188] sm:$0xff]
    %v130 = vlaneseq
    %v131 = vshrl.u32 %v130, 7
    %v132 = vsub.s32 0, %v131
    %v133 = vrot.slane %v129, %v132
    %vm134 = vcmask 261120
    %v136 = vsel %vm134, %v107, 0
    %v139 = vsel %vm134, %v108, 0
    %141 = vmatprep.subr.mxu0 0.0
    %142 = vmatpush1.msra.mxu0 0.0
    %143 = vmatprep.subr.mxu0 0.0
    %144 = vmatpush1.msra.mxu0 0.0
    %145 = vmatprep.subr.mxu0 0.0
    %146 = vmatpush1.msra.mxu0 0.0
    %147 = vmatprep.subr.mxu0 0.0
    %148 = vmatpush1.msra.mxu0 0.0
    %149 = vmatprep.subr.mxu0 0.0
    %150 = vmatpush1.msra.mxu0 0.0
    %151 = vmatprep.subr.mxu0 0.0
    %152 = vmatpush1.msra.mxu0 0.0
    %153 = vmatprep.subr.mxu0 0.0
    %154 = vmatpush1.msra.mxu0 0.0
    %155 = vmatprep.subr.mxu0 0.0
    %156 = vmatpush1.msra.mxu0 0.0
    %157 = vmatprep.subr.mxu0 0.0
    %158 = vmatpush1.msra.mxu0 0.0
    %159 = vmatprep.subr.mxu0 0.0
    %160 = vmatpush1.msra.mxu0 0.0
    %161 = vmatprep.subr.mxu0 0.0
    %162 = vmatpush1.msra.mxu0 0.0
    %163 = vmatprep.subr.mxu0 0.0
    %164 = vmatpush1.msra.mxu0 0.0
    %165 = vmatprep.subr.mxu0 0.0
    %166 = vmatpush1.msra.mxu0 %v116
    %167 = vmatprep.subr.mxu0 0.0
    %168 = vmatpush1.msra.mxu0 %v115
    %169 = vmatprep.subr.mxu0 0.0
    %170 = vmatpush1.msra.mxu0 %v114
    %171 = vmatprep.subr.mxu0 0.0
    %172 = vmatpush1.msra.mxu0 %v113
    %173 = vmatprep.subr.mxu0 0.0
    %174 = vmatpush2.msra.mxu0 0.0
    %175 = vmatprep.subr.mxu0 0.0
    %176 = vmatpush2.msra.mxu0 0.0
    %177 = vmatprep.subr.mxu0 0.0
    %178 = vmatpush2.msra.mxu0 0.0
    %179 = vmatprep.subr.mxu0 0.0
    %180 = vmatpush2.msra.mxu0 0.0
    %181 = vmatprep.subr.mxu0 0.0
    %182 = vmatpush2.msra.mxu0 0.0
    %183 = vmatprep.subr.mxu0 0.0
    %184 = vmatpush2.msra.mxu0 0.0
    %185 = vmatprep.subr.mxu0 0.0
    %186 = vmatpush2.msra.mxu0 0.0
    %187 = vmatprep.subr.mxu0 0.0
    %188 = vmatpush2.msra.mxu0 0.0
    %189 = vmatprep.subr.mxu0 0.0
    %190 = vmatpush2.msra.mxu0 0.0
    %191 = vmatprep.subr.mxu0 0.0
    %192 = vmatpush2.msra.mxu0 0.0
    %193 = vmatprep.subr.mxu0 0.0
    %194 = vmatpush2.msra.mxu0 0.0
    %195 = vmatprep.subr.mxu0 0.0
    %196 = vmatpush2.msra.mxu0 0.0
    %197 = vmatprep.subr.mxu0 0.0
    %198 = vmatpush2.msra.mxu0 0.0
    %199 = vmatprep.subr.mxu0 0.0
    %200 = vmatpush2.msra.mxu0 0.0
    %201 = vmatprep.subr.mxu0 0.0
    %202 = vmatpush2.msra.mxu0 0.0
    %203 = vmatprep.subr.mxu0 0.0
    %204 = vmatpush2.msra.mxu0 0.0
    %205 = vmatprep.mubr.f32.mxu0 0.0
    %206 = vmatmul.mubr.f32.gmra.mxu0 %v136
    %v207 = vpop.f32.mrf.mxu0
    %v208 = vadd.f32 %v133, %v207
    %v209 = vpop.f32.mrf.mxu0
    %210 = vmatprep.mubr.f32.mxu0 0.0
    %211 = vmatmul.mubr.f32.gmra.mxu0 %v139
    %v212 = vpop.f32.mrf.mxu0
    %v213 = vadd.f32 %v133, %v212
    %v214 = vpop.f32.mrf.mxu0
    %215 = vdwg.mxu0
    %220 = vrot.lane.b32.xlu0 %v109, 32
    %v221 = vpop.permute.xlu0 %220
    %222 = vrot.lane.b32.xlu0 %v110, 32
    %v223 = vpop.permute.xlu0 %222
    %224 = vrot.lane.b32.xlu0 %v111, 32
    %v225 = vpop.permute.xlu0 %224
    %226 = vrot.lane.b32.xlu0 %v112, 32
    %v227 = vpop.permute.xlu0 %226
    %v232 = vmul.f32 %v208, %v221
    %v233 = vmul.f32 %v208, %v223
    %v234 = vmul.f32 %v208, %v225
    %v235 = vmul.f32 %v208, %v227
    %236 = vrot.lane.b32.xlu0 %v109, 64
    %v237 = vpop.permute.xlu0 %236
    %238 = vrot.lane.b32.xlu0 %v110, 64
    %v239 = vpop.permute.xlu0 %238
    %240 = vrot.lane.b32.xlu0 %v111, 64
    %v241 = vpop.permute.xlu0 %240
    %242 = vrot.lane.b32.xlu0 %v112, 64
    %v243 = vpop.permute.xlu0 %242
    %v248 = vmul.f32 %v208, %v237
    %v249 = vmul.f32 %v208, %v239
    %v250 = vmul.f32 %v208, %v241
    %v251 = vmul.f32 %v208, %v243
    %256 = vrot.lane.b32.xlu0 %v232, 96
    %v257 = vpop.permute.xlu0 %256
    %258 = vrot.lane.b32.xlu0 %v233, 96
    %v259 = vpop.permute.xlu0 %258
    %260 = vrot.lane.b32.xlu0 %v234, 96
    %v261 = vpop.permute.xlu0 %260
    %262 = vrot.lane.b32.xlu0 %v235, 96
    %v263 = vpop.permute.xlu0 %262
    %v265 = vsel %vm134, %v208, 0
    %v267 = vsel %vm134, %v257, 0
    %v269 = vsel %vm134, %v259, 0
    %v271 = vsel %vm134, %v261, 0
    %v273 = vsel %vm134, %v263, 0
    %275 = vmatprep.subr.mxu0 0.0
    %276 = vmatpush1.xpose.msra.mxu0 0.0
    %277 = vmatprep.subr.mxu0 0.0
    %278 = vmatpush1.xpose.msra.mxu0 0.0
    %279 = vmatprep.subr.mxu0 0.0
    %280 = vmatpush1.xpose.msra.mxu0 0.0
    %281 = vmatprep.subr.mxu0 0.0
    %282 = vmatpush1.xpose.msra.mxu0 0.0
    %283 = vmatprep.subr.mxu0 0.0
    %284 = vmatpush1.xpose.msra.mxu0 0.0
    %285 = vmatprep.subr.mxu0 0.0
    %286 = vmatpush1.xpose.msra.mxu0 0.0
    %287 = vmatprep.subr.mxu0 0.0
    %288 = vmatpush1.xpose.msra.mxu0 0.0
    %289 = vmatprep.subr.mxu0 0.0
    %290 = vmatpush1.xpose.msra.mxu0 0.0
    %291 = vmatprep.subr.mxu0 0.0
    %292 = vmatpush1.xpose.msra.mxu0 0.0
    %293 = vmatprep.subr.mxu0 0.0
    %294 = vmatpush1.xpose.msra.mxu0 0.0
    %295 = vmatprep.subr.mxu0 0.0
    %296 = vmatpush1.xpose.msra.mxu0 0.0
    %297 = vmatprep.subr.mxu0 0.0
    %298 = vmatpush1.xpose.msra.mxu0 0.0
    %299 = vmatprep.subr.mxu0 0.0
    %300 = vmatpush1.xpose.msra.mxu0 %v273
    %301 = vmatprep.subr.mxu0 0.0
    %302 = vmatpush1.xpose.msra.mxu0 %v271
    %303 = vmatprep.subr.mxu0 0.0
    %304 = vmatpush1.xpose.msra.mxu0 %v269
    %305 = vmatprep.subr.mxu0 0.0
    %306 = vmatpush1.xpose.msra.mxu0 %v267
    %307 = vmatprep.subr.mxu0 0.0
    %308 = vmatpush2.xpose.msra.mxu0 0.0
    %309 = vmatprep.subr.mxu0 0.0
    %310 = vmatpush2.xpose.msra.mxu0 0.0
    %311 = vmatprep.subr.mxu0 0.0
    %312 = vmatpush2.xpose.msra.mxu0 0.0
    %313 = vmatprep.subr.mxu0 0.0
    %314 = vmatpush2.xpose.msra.mxu0 0.0
    %315 = vmatprep.subr.mxu0 0.0
    %316 = vmatpush2.xpose.msra.mxu0 0.0
    %317 = vmatprep.subr.mxu0 0.0
    %318 = vmatpush2.xpose.msra.mxu0 0.0
    %319 = vmatprep.subr.mxu0 0.0
    %320 = vmatpush2.xpose.msra.mxu0 0.0
    %321 = vmatprep.subr.mxu0 0.0
    %322 = vmatpush2.xpose.msra.mxu0 0.0
    %323 = vmatprep.subr.mxu0 0.0
    %324 = vmatpush2.xpose.msra.mxu0 0.0
    %325 = vmatprep.subr.mxu0 0.0
    %326 = vmatpush2.xpose.msra.mxu0 0.0
    %327 = vmatprep.subr.mxu0 0.0
    %328 = vmatpush2.xpose.msra.mxu0 0.0
    %329 = vmatprep.subr.mxu0 0.0
    %330 = vmatpush2.xpose.msra.mxu0 0.0
    %331 = vmatprep.subr.mxu0 0.0
    %332 = vmatpush2.xpose.msra.mxu0 0.0
    %333 = vmatprep.subr.mxu0 0.0
    %334 = vmatpush2.xpose.msra.mxu0 0.0
    %335 = vmatprep.subr.mxu0 0.0
    %336 = vmatpush2.xpose.msra.mxu0 0.0
    %337 = vmatprep.subr.mxu0 0.0
    %338 = vmatpush2.xpose.msra.mxu0 0.0
    %339 = vmatprep.mubr.f32.mxu0 0.0
    %340 = vmatmul.mubr.f32.gmra.mxu0 %v265
    %v341 = vpop.f32.mrf.mxu0
    %v342 = vadd.f32 0.0, %v341
    %v343 = vpop.f32.mrf.mxu0
    %344 = vdwg.mxu0
    %v345 = vsel %vm134, %v342, -inf
    %346 = vmax.xlane.f32.xlu0 %v345
    %v347 = vpop.xlane.xlu0 %346
    %v348 = vsub.f32 %v342, %v347
    %v349 = vmul.f32 %v348, 1.442695
    %v350 = vpow.pop %v349
    %351 = vrot.lane.b32.xlu0 %v109, 96
    %v352 = vpop.permute.xlu0 %351
    %353 = vrot.lane.b32.xlu0 %v110, 96
    %v354 = vpop.permute.xlu0 %353
    %355 = vrot.lane.b32.xlu0 %v111, 96
    %v356 = vpop.permute.xlu0 %355
    %357 = vrot.lane.b32.xlu0 %v112, 96
    %v358 = vpop.permute.xlu0 %357
    %v364 = vsel %vm134, %v350, 0
    %366 = vmatprep.subr.mxu0 0.0
    %367 = vmatpush1.msra.mxu0 0.0
    %368 = vmatprep.subr.mxu0 0.0
    %369 = vmatpush1.msra.mxu0 0.0
    %370 = vmatprep.subr.mxu0 0.0
    %371 = vmatpush1.msra.mxu0 0.0
    %372 = vmatprep.subr.mxu0 0.0
    %373 = vmatpush1.msra.mxu0 0.0
    %374 = vmatprep.subr.mxu0 0.0
    %375 = vmatpush1.msra.mxu0 0.0
    %376 = vmatprep.subr.mxu0 0.0
    %377 = vmatpush1.msra.mxu0 0.0
    %378 = vmatprep.subr.mxu0 0.0
    %379 = vmatpush1.msra.mxu0 0.0
    %380 = vmatprep.subr.mxu0 0.0
    %381 = vmatpush1.msra.mxu0 0.0
    %382 = vmatprep.subr.mxu0 0.0
    %383 = vmatpush1.msra.mxu0 0.0
    %384 = vmatprep.subr.mxu0 0.0
    %385 = vmatpush1.msra.mxu0 0.0
    %386 = vmatprep.subr.mxu0 0.0
    %387 = vmatpush1.msra.mxu0 0.0
    %388 = vmatprep.subr.mxu0 0.0
    %389 = vmatpush1.msra.mxu0 0.0
    %390 = vmatprep.subr.mxu0 0.0
    %391 = vmatpush1.msra.mxu0 %v358
    %392 = vmatprep.subr.mxu0 0.0
    %393 = vmatpush1.msra.mxu0 %v356
    %394 = vmatprep.subr.mxu0 0.0
    %395 = vmatpush1.msra.mxu0 %v354
    %396 = vmatprep.subr.mxu0 0.0
    %397 = vmatpush1.msra.mxu0 %v352
    %398 = vmatprep.subr.mxu0 0.0
    %399 = vmatpush2.msra.mxu0 0.0
    %400 = vmatprep.subr.mxu0 0.0
    %401 = vmatpush2.msra.mxu0 0.0
    %402 = vmatprep.subr.mxu0 0.0
    %403 = vmatpush2.msra.mxu0 0.0
    %404 = vmatprep.subr.mxu0 0.0
    %405 = vmatpush2.msra.mxu0 0.0
    %406 = vmatprep.subr.mxu0 0.0
    %407 = vmatpush2.msra.mxu0 0.0
    %408 = vmatprep.subr.mxu0 0.0
    %409 = vmatpush2.msra.mxu0 0.0
    %410 = vmatprep.subr.mxu0 0.0
    %411 = vmatpush2.msra.mxu0 0.0
    %412 = vmatprep.subr.mxu0 0.0
    %413 = vmatpush2.msra.mxu0 0.0
    %414 = vmatprep.subr.mxu0 0.0
    %415 = vmatpush2.msra.mxu0 0.0
    %416 = vmatprep.subr.mxu0 0.0
    %417 = vmatpush2.msra.mxu0 0.0
    %418 = vmatprep.subr.mxu0 0.0
    %419 = vmatpush2.msra.mxu0 0.0
    %420 = vmatprep.subr.mxu0 0.0
    %421 = vmatpush2.msra.mxu0 0.0
    %422 = vmatprep.subr.mxu0 0.0
    %423 = vmatpush2.msra.mxu0 0.0
    %424 = vmatprep.subr.mxu0 0.0
    %425 = vmatpush2.msra.mxu0 0.0
    %426 = vmatprep.subr.mxu0 0.0
    %427 = vmatpush2.msra.mxu0 0.0
    %428 = vmatprep.subr.mxu0 0.0
    %429 = vmatpush2.msra.mxu0 0.0
    %430 = vmatprep.mubr.f32.mxu0 0.0
    %431 = vmatmul.mubr.f32.gmra.mxu0 %v364
    %v432 = vpop.f32.mrf.mxu0
    %v433 = vadd.f32 0.0, %v432
    %v434 = vpop.f32.mrf.mxu0
    %435 = vdwg.mxu0
    %v436 = vrcp.pop %v433
    %v437 = vmul.f32 %v350, %v436
    %442 = vrot.lane.b32.xlu0 %v248, 64
    %v443 = vpop.permute.xlu0 %442
    %444 = vrot.lane.b32.xlu0 %v249, 64
    %v445 = vpop.permute.xlu0 %444
    %446 = vrot.lane.b32.xlu0 %v250, 64
    %v447 = vpop.permute.xlu0 %446
    %448 = vrot.lane.b32.xlu0 %v251, 64
    %v449 = vpop.permute.xlu0 %448
    %v455 = vsel %vm134, %v437, 0
    %457 = vmatprep.subr.mxu0 0.0
    %458 = vmatpush1.msra.mxu0 0.0
    %459 = vmatprep.subr.mxu0 0.0
    %460 = vmatpush1.msra.mxu0 0.0
    %461 = vmatprep.subr.mxu0 0.0
    %462 = vmatpush1.msra.mxu0 0.0
    %463 = vmatprep.subr.mxu0 0.0
    %464 = vmatpush1.msra.mxu0 0.0
    %465 = vmatprep.subr.mxu0 0.0
    %466 = vmatpush1.msra.mxu0 0.0
    %467 = vmatprep.subr.mxu0 0.0
    %468 = vmatpush1.msra.mxu0 0.0
    %469 = vmatprep.subr.mxu0 0.0
    %470 = vmatpush1.msra.mxu0 0.0
    %471 = vmatprep.subr.mxu0 0.0
    %472 = vmatpush1.msra.mxu0 0.0
    %473 = vmatprep.subr.mxu0 0.0
    %474 = vmatpush1.msra.mxu0 0.0
    %475 = vmatprep.subr.mxu0 0.0
    %476 = vmatpush1.msra.mxu0 0.0
    %477 = vmatprep.subr.mxu0 0.0
    %478 = vmatpush1.msra.mxu0 0.0
    %479 = vmatprep.subr.mxu0 0.0
    %480 = vmatpush1.msra.mxu0 0.0
    %481 = vmatprep.subr.mxu0 0.0
    %482 = vmatpush1.msra.mxu0 %v449
    %483 = vmatprep.subr.mxu0 0.0
    %484 = vmatpush1.msra.mxu0 %v447
    %485 = vmatprep.subr.mxu0 0.0
    %486 = vmatpush1.msra.mxu0 %v445
    %487 = vmatprep.subr.mxu0 0.0
    %488 = vmatpush1.msra.mxu0 %v443
    %489 = vmatprep.subr.mxu0 0.0
    %490 = vmatpush2.msra.mxu0 0.0
    %491 = vmatprep.subr.mxu0 0.0
    %492 = vmatpush2.msra.mxu0 0.0
    %493 = vmatprep.subr.mxu0 0.0
    %494 = vmatpush2.msra.mxu0 0.0
    %495 = vmatprep.subr.mxu0 0.0
    %496 = vmatpush2.msra.mxu0 0.0
    %497 = vmatprep.subr.mxu0 0.0
    %498 = vmatpush2.msra.mxu0 0.0
    %499 = vmatprep.subr.mxu0 0.0
    %500 = vmatpush2.msra.mxu0 0.0
    %501 = vmatprep.subr.mxu0 0.0
    %502 = vmatpush2.msra.mxu0 0.0
    %503 = vmatprep.subr.mxu0 0.0
    %504 = vmatpush2.msra.mxu0 0.0
    %505 = vmatprep.subr.mxu0 0.0
    %506 = vmatpush2.msra.mxu0 0.0
    %507 = vmatprep.subr.mxu0 0.0
    %508 = vmatpush2.msra.mxu0 0.0
    %509 = vmatprep.subr.mxu0 0.0
    %510 = vmatpush2.msra.mxu0 0.0
    %511 = vmatprep.subr.mxu0 0.0
    %512 = vmatpush2.msra.mxu0 0.0
    %513 = vmatprep.subr.mxu0 0.0
    %514 = vmatpush2.msra.mxu0 0.0
    %515 = vmatprep.subr.mxu0 0.0
    %516 = vmatpush2.msra.mxu0 0.0
    %517 = vmatprep.subr.mxu0 0.0
    %518 = vmatpush2.msra.mxu0 0.0
    %519 = vmatprep.subr.mxu0 0.0
    %520 = vmatpush2.msra.mxu0 0.0
    %521 = vmatprep.mubr.f32.mxu0 0.0
    %522 = vmatmul.mubr.f32.gmra.mxu0 %v455
    %v523 = vpop.f32.mrf.mxu0
    %v524 = vadd.f32 0.0, %v523
    %v525 = vpop.f32.mrf.mxu0
    %526 = vdwg.mxu0
    %v527 = vmul.f32 %v213, %v221
    %v528 = vmul.f32 %v213, %v223
    %v529 = vmul.f32 %v213, %v225
    %v530 = vmul.f32 %v213, %v227
    %v531 = vmul.f32 %v213, %v237
    %v532 = vmul.f32 %v213, %v239
    %v533 = vmul.f32 %v213, %v241
    %v534 = vmul.f32 %v213, %v243
    %539 = vrot.lane.b32.xlu0 %v527, 96
    %v540 = vpop.permute.xlu0 %539
    %541 = vrot.lane.b32.xlu0 %v528, 96
    %v542 = vpop.permute.xlu0 %541
    %543 = vrot.lane.b32.xlu0 %v529, 96
    %v544 = vpop.permute.xlu0 %543
    %545 = vrot.lane.b32.xlu0 %v530, 96
    %v546 = vpop.permute.xlu0 %545
    %v548 = vsel %vm134, %v213, 0
    %v550 = vsel %vm134, %v540, 0
    %v552 = vsel %vm134, %v542, 0
    %v554 = vsel %vm134, %v544, 0
    %v556 = vsel %vm134, %v546, 0
    %558 = vmatprep.subr.mxu0 0.0
    %559 = vmatpush1.xpose.msra.mxu0 0.0
    %560 = vmatprep.subr.mxu0 0.0
    %561 = vmatpush1.xpose.msra.mxu0 0.0
    %562 = vmatprep.subr.mxu0 0.0
    %563 = vmatpush1.xpose.msra.mxu0 0.0
    %564 = vmatprep.subr.mxu0 0.0
    %565 = vmatpush1.xpose.msra.mxu0 0.0
    %566 = vmatprep.subr.mxu0 0.0
    %567 = vmatpush1.xpose.msra.mxu0 0.0
    %568 = vmatprep.subr.mxu0 0.0
    %569 = vmatpush1.xpose.msra.mxu0 0.0
    %570 = vmatprep.subr.mxu0 0.0
    %571 = vmatpush1.xpose.msra.mxu0 0.0
    %572 = vmatprep.subr.mxu0 0.0
    %573 = vmatpush1.xpose.msra.mxu0 0.0
    %574 = vmatprep.subr.mxu0 0.0
    %575 = vmatpush1.xpose.msra.mxu0 0.0
    %576 = vmatprep.subr.mxu0 0.0
    %577 = vmatpush1.xpose.msra.mxu0 0.0
    %578 = vmatprep.subr.mxu0 0.0
    %579 = vmatpush1.xpose.msra.mxu0 0.0
    %580 = vmatprep.subr.mxu0 0.0
    %581 = vmatpush1.xpose.msra.mxu0 0.0
    %582 = vmatprep.subr.mxu0 0.0
    %583 = vmatpush1.xpose.msra.mxu0 %v556
    %584 = vmatprep.subr.mxu0 0.0
    %585 = vmatpush1.xpose.msra.mxu0 %v554
    %586 = vmatprep.subr.mxu0 0.0
    %587 = vmatpush1.xpose.msra.mxu0 %v552
    %588 = vmatprep.subr.mxu0 0.0
    %589 = vmatpush1.xpose.msra.mxu0 %v550
    %590 = vmatprep.subr.mxu0 0.0
    %591 = vmatpush2.xpose.msra.mxu0 0.0
    %592 = vmatprep.subr.mxu0 0.0
    %593 = vmatpush2.xpose.msra.mxu0 0.0
    %594 = vmatprep.subr.mxu0 0.0
    %595 = vmatpush2.xpose.msra.mxu0 0.0
    %596 = vmatprep.subr.mxu0 0.0
    %597 = vmatpush2.xpose.msra.mxu0 0.0
    %598 = vmatprep.subr.mxu0 0.0
    %599 = vmatpush2.xpose.msra.mxu0 0.0
    %600 = vmatprep.subr.mxu0 0.0
    %601 = vmatpush2.xpose.msra.mxu0 0.0
    %602 = vmatprep.subr.mxu0 0.0
    %603 = vmatpush2.xpose.msra.mxu0 0.0
    %604 = vmatprep.subr.mxu0 0.0
    %605 = vmatpush2.xpose.msra.mxu0 0.0
    %606 = vmatprep.subr.mxu0 0.0
    %607 = vmatpush2.xpose.msra.mxu0 0.0
    %608 = vmatprep.subr.mxu0 0.0
    %609 = vmatpush2.xpose.msra.mxu0 0.0
    %610 = vmatprep.subr.mxu0 0.0
    %611 = vmatpush2.xpose.msra.mxu0 0.0
    %612 = vmatprep.subr.mxu0 0.0
    %613 = vmatpush2.xpose.msra.mxu0 0.0
    %614 = vmatprep.subr.mxu0 0.0
    %615 = vmatpush2.xpose.msra.mxu0 0.0
    %616 = vmatprep.subr.mxu0 0.0
    %617 = vmatpush2.xpose.msra.mxu0 0.0
    %618 = vmatprep.subr.mxu0 0.0
    %619 = vmatpush2.xpose.msra.mxu0 0.0
    %620 = vmatprep.subr.mxu0 0.0
    %621 = vmatpush2.xpose.msra.mxu0 0.0
    %622 = vmatprep.mubr.f32.mxu0 0.0
    %623 = vmatmul.mubr.f32.gmra.mxu0 %v548
    %v624 = vpop.f32.mrf.mxu0
    %v625 = vadd.f32 0.0, %v624
    %v626 = vpop.f32.mrf.mxu0
    %627 = vdwg.mxu0
    %v628 = vsel %vm134, %v625, -inf
    %629 = vmax.xlane.f32.xlu0 %v628
    %v630 = vpop.xlane.xlu0 %629
    %v631 = vsub.f32 %v625, %v630
    %v632 = vmul.f32 %v631, 1.442695
    %v633 = vpow.pop %v632
    %v635 = vsel %vm134, %v633, 0
    %637 = vmatprep.subr.mxu0 0.0
    %638 = vmatpush1.msra.mxu0 0.0
    %639 = vmatprep.subr.mxu0 0.0
    %640 = vmatpush1.msra.mxu0 0.0
    %641 = vmatprep.subr.mxu0 0.0
    %642 = vmatpush1.msra.mxu0 0.0
    %643 = vmatprep.subr.mxu0 0.0
    %644 = vmatpush1.msra.mxu0 0.0
    %645 = vmatprep.subr.mxu0 0.0
    %646 = vmatpush1.msra.mxu0 0.0
    %647 = vmatprep.subr.mxu0 0.0
    %648 = vmatpush1.msra.mxu0 0.0
    %649 = vmatprep.subr.mxu0 0.0
    %650 = vmatpush1.msra.mxu0 0.0
    %651 = vmatprep.subr.mxu0 0.0
    %652 = vmatpush1.msra.mxu0 0.0
    %653 = vmatprep.subr.mxu0 0.0
    %654 = vmatpush1.msra.mxu0 0.0
    %655 = vmatprep.subr.mxu0 0.0
    %656 = vmatpush1.msra.mxu0 0.0
    %657 = vmatprep.subr.mxu0 0.0
    %658 = vmatpush1.msra.mxu0 0.0
    %659 = vmatprep.subr.mxu0 0.0
    %660 = vmatpush1.msra.mxu0 0.0
    %661 = vmatprep.subr.mxu0 0.0
    %662 = vmatpush1.msra.mxu0 %v358
    %663 = vmatprep.subr.mxu0 0.0
    %664 = vmatpush1.msra.mxu0 %v356
    %665 = vmatprep.subr.mxu0 0.0
    %666 = vmatpush1.msra.mxu0 %v354
    %667 = vmatprep.subr.mxu0 0.0
    %668 = vmatpush1.msra.mxu0 %v352
    %669 = vmatprep.subr.mxu0 0.0
    %670 = vmatpush2.msra.mxu0 0.0
    %671 = vmatprep.subr.mxu0 0.0
    %672 = vmatpush2.msra.mxu0 0.0
    %673 = vmatprep.subr.mxu0 0.0
    %674 = vmatpush2.msra.mxu0 0.0
    %675 = vmatprep.subr.mxu0 0.0
    %676 = vmatpush2.msra.mxu0 0.0
    %677 = vmatprep.subr.mxu0 0.0
    %678 = vmatpush2.msra.mxu0 0.0
    %679 = vmatprep.subr.mxu0 0.0
    %680 = vmatpush2.msra.mxu0 0.0
    %681 = vmatprep.subr.mxu0 0.0
    %682 = vmatpush2.msra.mxu0 0.0
    %683 = vmatprep.subr.mxu0 0.0
    %684 = vmatpush2.msra.mxu0 0.0
    %685 = vmatprep.subr.mxu0 0.0
    %686 = vmatpush2.msra.mxu0 0.0
    %687 = vmatprep.subr.mxu0 0.0
    %688 = vmatpush2.msra.mxu0 0.0
    %689 = vmatprep.subr.mxu0 0.0
    %690 = vmatpush2.msra.mxu0 0.0
    %691 = vmatprep.subr.mxu0 0.0
    %692 = vmatpush2.msra.mxu0 0.0
    %693 = vmatprep.subr.mxu0 0.0
    %694 = vmatpush2.msra.mxu0 0.0
    %695 = vmatprep.subr.mxu0 0.0
    %696 = vmatpush2.msra.mxu0 0.0
    %697 = vmatprep.subr.mxu0 0.0
    %698 = vmatpush2.msra.mxu0 0.0
    %699 = vmatprep.subr.mxu0 0.0
    %700 = vmatpush2.msra.mxu0 0.0
    %701 = vmatprep.mubr.f32.mxu0 0.0
    %702 = vmatmul.mubr.f32.gmra.mxu0 %v635
    %v703 = vpop.f32.mrf.mxu0
    %v704 = vadd.f32 0.0, %v703
    %v705 = vpop.f32.mrf.mxu0
    %706 = vdwg.mxu0
    %v707 = vrcp.pop %v704
    %v708 = vmul.f32 %v633, %v707
    %713 = vrot.lane.b32.xlu0 %v531, 64
    %v714 = vpop.permute.xlu0 %713
    %715 = vrot.lane.b32.xlu0 %v532, 64
    %v716 = vpop.permute.xlu0 %715
    %717 = vrot.lane.b32.xlu0 %v533, 64
    %v718 = vpop.permute.xlu0 %717
    %719 = vrot.lane.b32.xlu0 %v534, 64
    %v720 = vpop.permute.xlu0 %719
    %v726 = vsel %vm134, %v708, 0
    %728 = vmatprep.subr.mxu0 0.0
    %729 = vmatpush1.msra.mxu0 0.0
    %730 = vmatprep.subr.mxu0 0.0
    %731 = vmatpush1.msra.mxu0 0.0
    %732 = vmatprep.subr.mxu0 0.0
    %733 = vmatpush1.msra.mxu0 0.0
    %734 = vmatprep.subr.mxu0 0.0
    %735 = vmatpush1.msra.mxu0 0.0
    %736 = vmatprep.subr.mxu0 0.0
    %737 = vmatpush1.msra.mxu0 0.0
    %738 = vmatprep.subr.mxu0 0.0
    %739 = vmatpush1.msra.mxu0 0.0
    %740 = vmatprep.subr.mxu0 0.0
    %741 = vmatpush1.msra.mxu0 0.0
    %742 = vmatprep.subr.mxu0 0.0
    %743 = vmatpush1.msra.mxu0 0.0
    %744 = vmatprep.subr.mxu0 0.0
    %745 = vmatpush1.msra.mxu0 0.0
    %746 = vmatprep.subr.mxu0 0.0
    %747 = vmatpush1.msra.mxu0 0.0
    %748 = vmatprep.subr.mxu0 0.0
    %749 = vmatpush1.msra.mxu0 0.0
    %750 = vmatprep.subr.mxu0 0.0
    %751 = vmatpush1.msra.mxu0 0.0
    %752 = vmatprep.subr.mxu0 0.0
    %753 = vmatpush1.msra.mxu0 %v720
    %754 = vmatprep.subr.mxu0 0.0
    %755 = vmatpush1.msra.mxu0 %v718
    %756 = vmatprep.subr.mxu0 0.0
    %757 = vmatpush1.msra.mxu0 %v716
    %758 = vmatprep.subr.mxu0 0.0
    %759 = vmatpush1.msra.mxu0 %v714
    %760 = vmatprep.subr.mxu0 0.0
    %761 = vmatpush2.msra.mxu0 0.0
    %762 = vmatprep.subr.mxu0 0.0
    %763 = vmatpush2.msra.mxu0 0.0
    %764 = vmatprep.subr.mxu0 0.0
    %765 = vmatpush2.msra.mxu0 0.0
    %766 = vmatprep.subr.mxu0 0.0
    %767 = vmatpush2.msra.mxu0 0.0
    %768 = vmatprep.subr.mxu0 0.0
    %769 = vmatpush2.msra.mxu0 0.0
    %770 = vmatprep.subr.mxu0 0.0
    %771 = vmatpush2.msra.mxu0 0.0
    %772 = vmatprep.subr.mxu0 0.0
    %773 = vmatpush2.msra.mxu0 0.0
    %774 = vmatprep.subr.mxu0 0.0
    %775 = vmatpush2.msra.mxu0 0.0
    %776 = vmatprep.subr.mxu0 0.0
    %777 = vmatpush2.msra.mxu0 0.0
    %778 = vmatprep.subr.mxu0 0.0
    %779 = vmatpush2.msra.mxu0 0.0
    %780 = vmatprep.subr.mxu0 0.0
    %781 = vmatpush2.msra.mxu0 0.0
    %782 = vmatprep.subr.mxu0 0.0
    %783 = vmatpush2.msra.mxu0 0.0
    %784 = vmatprep.subr.mxu0 0.0
    %785 = vmatpush2.msra.mxu0 0.0
    %786 = vmatprep.subr.mxu0 0.0
    %787 = vmatpush2.msra.mxu0 0.0
    %788 = vmatprep.subr.mxu0 0.0
    %789 = vmatpush2.msra.mxu0 0.0
    %790 = vmatprep.subr.mxu0 0.0
    %791 = vmatpush2.msra.mxu0 0.0
    %792 = vmatprep.mubr.f32.mxu0 0.0
    %793 = vmatmul.mubr.f32.gmra.mxu0 %v726
    %v794 = vpop.f32.mrf.mxu0
    %v795 = vadd.f32 0.0, %v794
    %v796 = vpop.f32.mrf.mxu0
    %797 = vdwg.mxu0
    %v798 = vlaneseq
    %v799 = vshrl.u32 %v798, 7
    %v800 = vsub.s32 1, %v799
    %v801 = vrot.slane %v129, %v800
    %806 = vrot.lane.b32.xlu0 %v113, 32
    %v807 = vpop.permute.xlu0 %806
    %808 = vrot.lane.b32.xlu0 %v114, 32
    %v809 = vpop.permute.xlu0 %808
    %810 = vrot.lane.b32.xlu0 %v115, 32
    %v811 = vpop.permute.xlu0 %810
    %812 = vrot.lane.b32.xlu0 %v116, 32
    %v813 = vpop.permute.xlu0 %812
    %v819 = vsel %vm134, %v524, 0
    %v822 = vsel %vm134, %v795, 0
    %824 = vmatprep.subr.mxu0 0.0
    %825 = vmatpush1.msra.mxu0 0.0
    %826 = vmatprep.subr.mxu0 0.0
    %827 = vmatpush1.msra.mxu0 0.0
    %828 = vmatprep.subr.mxu0 0.0
    %829 = vmatpush1.msra.mxu0 0.0
    %830 = vmatprep.subr.mxu0 0.0
    %831 = vmatpush1.msra.mxu0 0.0
    %832 = vmatprep.subr.mxu0 0.0
    %833 = vmatpush1.msra.mxu0 0.0
    %834 = vmatprep.subr.mxu0 0.0
    %835 = vmatpush1.msra.mxu0 0.0
    %836 = vmatprep.subr.mxu0 0.0
    %837 = vmatpush1.msra.mxu0 0.0
    %838 = vmatprep.subr.mxu0 0.0
    %839 = vmatpush1.msra.mxu0 0.0
    %840 = vmatprep.subr.mxu0 0.0
    %841 = vmatpush1.msra.mxu0 0.0
    %842 = vmatprep.subr.mxu0 0.0
    %843 = vmatpush1.msra.mxu0 0.0
    %844 = vmatprep.subr.mxu0 0.0
    %845 = vmatpush1.msra.mxu0 0.0
    %846 = vmatprep.subr.mxu0 0.0
    %847 = vmatpush1.msra.mxu0 0.0
    %848 = vmatprep.subr.mxu0 0.0
    %849 = vmatpush1.msra.mxu0 %v813
    %850 = vmatprep.subr.mxu0 0.0
    %851 = vmatpush1.msra.mxu0 %v811
    %852 = vmatprep.subr.mxu0 0.0
    %853 = vmatpush1.msra.mxu0 %v809
    %854 = vmatprep.subr.mxu0 0.0
    %855 = vmatpush1.msra.mxu0 %v807
    %856 = vmatprep.subr.mxu0 0.0
    %857 = vmatpush2.msra.mxu0 0.0
    %858 = vmatprep.subr.mxu0 0.0
    %859 = vmatpush2.msra.mxu0 0.0
    %860 = vmatprep.subr.mxu0 0.0
    %861 = vmatpush2.msra.mxu0 0.0
    %862 = vmatprep.subr.mxu0 0.0
    %863 = vmatpush2.msra.mxu0 0.0
    %864 = vmatprep.subr.mxu0 0.0
    %865 = vmatpush2.msra.mxu0 0.0
    %866 = vmatprep.subr.mxu0 0.0
    %867 = vmatpush2.msra.mxu0 0.0
    %868 = vmatprep.subr.mxu0 0.0
    %869 = vmatpush2.msra.mxu0 0.0
    %870 = vmatprep.subr.mxu0 0.0
    %871 = vmatpush2.msra.mxu0 0.0
    %872 = vmatprep.subr.mxu0 0.0
    %873 = vmatpush2.msra.mxu0 0.0
    %874 = vmatprep.subr.mxu0 0.0
    %875 = vmatpush2.msra.mxu0 0.0
    %876 = vmatprep.subr.mxu0 0.0
    %877 = vmatpush2.msra.mxu0 0.0
    %878 = vmatprep.subr.mxu0 0.0
    %879 = vmatpush2.msra.mxu0 0.0
    %880 = vmatprep.subr.mxu0 0.0
    %881 = vmatpush2.msra.mxu0 0.0
    %882 = vmatprep.subr.mxu0 0.0
    %883 = vmatpush2.msra.mxu0 0.0
    %884 = vmatprep.subr.mxu0 0.0
    %885 = vmatpush2.msra.mxu0 0.0
    %886 = vmatprep.subr.mxu0 0.0
    %887 = vmatpush2.msra.mxu0 0.0
    %888 = vmatprep.mubr.f32.mxu0 0.0
    %889 = vmatmul.mubr.f32.gmra.mxu0 %v819
    %v890 = vpop.f32.mrf.mxu0
    %v891 = vadd.f32 %v801, %v890
    %v892 = vpop.f32.mrf.mxu0
    %893 = vmatprep.mubr.f32.mxu0 0.0
    %894 = vmatmul.mubr.f32.gmra.mxu0 %v822
    %v895 = vpop.f32.mrf.mxu0
    %v896 = vadd.f32 %v801, %v895
    %v897 = vpop.f32.mrf.mxu0
    %898 = vdwg.mxu0
    %v899 = vadd.f32 %v107, %v891
    %v900 = vadd.f32 %v108, %v896
    %v901 = vsel %vm134, %v899, 0.0
    %902 = vadd.xlane.f32.xlu0 %v901
    %v903 = vpop.xlane.xlu0 %902
    %v904 = vsel %vm134, %v900, 0.0
    %905 = vadd.xlane.f32.xlu0 %v904
    %v906 = vpop.xlane.xlu0 %905
    %v907 = vrcp.pop 32.0
    %v908 = vmul.f32 %v903, %v907
    %v909 = vmul.f32 %v906, %v907
    %v910 = vsub.f32 %v899, %v908
    %v911 = vsub.f32 %v900, %v909
    %v912 = vmul.f32 %v910, %v910
    %v913 = vmul.f32 %v911, %v911
    %v914 = vsel %vm134, %v912, 0.0
    %915 = vadd.xlane.f32.xlu0 %v914
    %v916 = vpop.xlane.xlu0 %915
    %v917 = vsel %vm134, %v913, 0.0
    %918 = vadd.xlane.f32.xlu0 %v917
    %v919 = vpop.xlane.xlu0 %918
    %v920 = vmul.f32 %v916, %v907
    %v921 = vmul.f32 %v919, %v907
    %v922 = vadd.f32 %v920, 1e-05
    %v923 = vadd.f32 %v921, 1e-05
    %v924 = vrsqrt.pop %v922
    %v925 = vrsqrt.pop %v923
    %v926 = vmul.f32 %v910, %v924
    %v927 = vmul.f32 %v911, %v925
    %v928 = vlaneseq
    %v929 = vshrl.u32 %v928, 7
    %v930 = vsub.s32 4, %v929
    %v931 = vrot.slane %v129, %v930
    %v932 = vmul.f32 %v926, %v931
    %v933 = vmul.f32 %v927, %v931
    %v934 = vlaneseq
    %v935 = vshrl.u32 %v934, 7
    %v936 = vsub.s32 5, %v935
    %v937 = vrot.slane %v129, %v936
    %v938 = vadd.f32 %v932, %v937
    %v939 = vadd.f32 %v933, %v937
    %v940 = vlaneseq
    %v941 = vshrl.u32 %v940, 7
    %v942 = vsub.s32 2, %v941
    %v943 = vrot.slane %v129, %v942
    %v945 = vsel %vm134, %v938, 0
    %v948 = vsel %vm134, %v939, 0
    %950 = vmatprep.subr.mxu0 0.0
    %951 = vmatpush1.msra.mxu0 0.0
    %952 = vmatprep.subr.mxu0 0.0
    %953 = vmatpush1.msra.mxu0 0.0
    %954 = vmatprep.subr.mxu0 0.0
    %955 = vmatpush1.msra.mxu0 0.0
    %956 = vmatprep.subr.mxu0 0.0
    %957 = vmatpush1.msra.mxu0 0.0
    %958 = vmatprep.subr.mxu0 0.0
    %959 = vmatpush1.msra.mxu0 0.0
    %960 = vmatprep.subr.mxu0 0.0
    %961 = vmatpush1.msra.mxu0 0.0
    %962 = vmatprep.subr.mxu0 0.0
    %963 = vmatpush1.msra.mxu0 0.0
    %964 = vmatprep.subr.mxu0 0.0
    %965 = vmatpush1.msra.mxu0 0.0
    %966 = vmatprep.subr.mxu0 0.0
    %967 = vmatpush1.msra.mxu0 0.0
    %968 = vmatprep.subr.mxu0 0.0
    %969 = vmatpush1.msra.mxu0 0.0
    %970 = vmatprep.subr.mxu0 0.0
    %971 = vmatpush1.msra.mxu0 0.0
    %972 = vmatprep.subr.mxu0 0.0
    %973 = vmatpush1.msra.mxu0 0.0
    %974 = vmatprep.subr.mxu0 0.0
    %975 = vmatpush1.msra.mxu0 %v120
    %976 = vmatprep.subr.mxu0 0.0
    %977 = vmatpush1.msra.mxu0 %v119
    %978 = vmatprep.subr.mxu0 0.0
    %979 = vmatpush1.msra.mxu0 %v118
    %980 = vmatprep.subr.mxu0 0.0
    %981 = vmatpush1.msra.mxu0 %v117
    %982 = vmatprep.subr.mxu0 0.0
    %983 = vmatpush2.msra.mxu0 0.0
    %984 = vmatprep.subr.mxu0 0.0
    %985 = vmatpush2.msra.mxu0 0.0
    %986 = vmatprep.subr.mxu0 0.0
    %987 = vmatpush2.msra.mxu0 0.0
    %988 = vmatprep.subr.mxu0 0.0
    %989 = vmatpush2.msra.mxu0 0.0
    %990 = vmatprep.subr.mxu0 0.0
    %991 = vmatpush2.msra.mxu0 0.0
    %992 = vmatprep.subr.mxu0 0.0
    %993 = vmatpush2.msra.mxu0 0.0
    %994 = vmatprep.subr.mxu0 0.0
    %995 = vmatpush2.msra.mxu0 0.0
    %996 = vmatprep.subr.mxu0 0.0
    %997 = vmatpush2.msra.mxu0 0.0
    %998 = vmatprep.subr.mxu0 0.0
    %999 = vmatpush2.msra.mxu0 0.0
    %1000 = vmatprep.subr.mxu0 0.0
    %1001 = vmatpush2.msra.mxu0 0.0
    %1002 = vmatprep.subr.mxu0 0.0
    %1003 = vmatpush2.msra.mxu0 0.0
    %1004 = vmatprep.subr.mxu0 0.0
    %1005 = vmatpush2.msra.mxu0 0.0
    %1006 = vmatprep.subr.mxu0 0.0
    %1007 = vmatpush2.msra.mxu0 0.0
    %1008 = vmatprep.subr.mxu0 0.0
    %1009 = vmatpush2.msra.mxu0 0.0
    %1010 = vmatprep.subr.mxu0 0.0
    %1011 = vmatpush2.msra.mxu0 0.0
    %1012 = vmatprep.subr.mxu0 0.0
    %1013 = vmatpush2.msra.mxu0 0.0
    %1014 = vmatprep.mubr.f32.mxu0 0.0
    %1015 = vmatmul.mubr.f32.gmra.mxu0 %v945
    %v1016 = vpop.f32.mrf.mxu0
    %v1017 = vadd.f32 %v943, %v1016
    %v1018 = vpop.f32.mrf.mxu0
    %1019 = vmatprep.mubr.f32.mxu0 0.0
    %1020 = vmatmul.mubr.f32.gmra.mxu0 %v948
    %v1021 = vpop.f32.mrf.mxu0
    %v1022 = vadd.f32 %v943, %v1021
    %v1023 = vpop.f32.mrf.mxu0
    %1024 = vdwg.mxu0
    %v1025 = vmax.f32 %v1017, 0.0
    %v1026 = vmax.f32 %v1022, 0.0
    %v1027 = vlaneseq
    %v1028 = vshrl.u32 %v1027, 7
    %v1029 = vsub.s32 3, %v1028
    %v1030 = vrot.slane %v129, %v1029
    %vm1031 = vcmask 523264
    %v1033 = vsel %vm1031, %v1025, 0
    %v1036 = vsel %vm1031, %v1026, 0
    %1038 = vmatprep.subr.mxu0 0.0
    %1039 = vmatpush1.msra.mxu0 0.0
    %1040 = vmatprep.subr.mxu0 0.0
    %1041 = vmatpush1.msra.mxu0 0.0
    %1042 = vmatprep.subr.mxu0 0.0
    %1043 = vmatpush1.msra.mxu0 0.0
    %1044 = vmatprep.subr.mxu0 0.0
    %1045 = vmatpush1.msra.mxu0 0.0
    %1046 = vmatprep.subr.mxu0 0.0
    %1047 = vmatpush1.msra.mxu0 0.0
    %1048 = vmatprep.subr.mxu0 0.0
    %1049 = vmatpush1.msra.mxu0 0.0
    %1050 = vmatprep.subr.mxu0 0.0
    %1051 = vmatpush1.msra.mxu0 0.0
    %1052 = vmatprep.subr.mxu0 0.0
    %1053 = vmatpush1.msra.mxu0 0.0
    %1054 = vmatprep.subr.mxu0 0.0
    %1055 = vmatpush1.msra.mxu0 %v128
    %1056 = vmatprep.subr.mxu0 0.0
    %1057 = vmatpush1.msra.mxu0 %v127
    %1058 = vmatprep.subr.mxu0 0.0
    %1059 = vmatpush1.msra.mxu0 %v126
    %1060 = vmatprep.subr.mxu0 0.0
    %1061 = vmatpush1.msra.mxu0 %v125
    %1062 = vmatprep.subr.mxu0 0.0
    %1063 = vmatpush1.msra.mxu0 %v124
    %1064 = vmatprep.subr.mxu0 0.0
    %1065 = vmatpush1.msra.mxu0 %v123
    %1066 = vmatprep.subr.mxu0 0.0
    %1067 = vmatpush1.msra.mxu0 %v122
    %1068 = vmatprep.subr.mxu0 0.0
    %1069 = vmatpush1.msra.mxu0 %v121
    %1070 = vmatprep.subr.mxu0 0.0
    %1071 = vmatpush2.msra.mxu0 0.0
    %1072 = vmatprep.subr.mxu0 0.0
    %1073 = vmatpush2.msra.mxu0 0.0
    %1074 = vmatprep.subr.mxu0 0.0
    %1075 = vmatpush2.msra.mxu0 0.0
    %1076 = vmatprep.subr.mxu0 0.0
    %1077 = vmatpush2.msra.mxu0 0.0
    %1078 = vmatprep.subr.mxu0 0.0
    %1079 = vmatpush2.msra.mxu0 0.0
    %1080 = vmatprep.subr.mxu0 0.0
    %1081 = vmatpush2.msra.mxu0 0.0
    %1082 = vmatprep.subr.mxu0 0.0
    %1083 = vmatpush2.msra.mxu0 0.0
    %1084 = vmatprep.subr.mxu0 0.0
    %1085 = vmatpush2.msra.mxu0 0.0
    %1086 = vmatprep.subr.mxu0 0.0
    %1087 = vmatpush2.msra.mxu0 0.0
    %1088 = vmatprep.subr.mxu0 0.0
    %1089 = vmatpush2.msra.mxu0 0.0
    %1090 = vmatprep.subr.mxu0 0.0
    %1091 = vmatpush2.msra.mxu0 0.0
    %1092 = vmatprep.subr.mxu0 0.0
    %1093 = vmatpush2.msra.mxu0 0.0
    %1094 = vmatprep.subr.mxu0 0.0
    %1095 = vmatpush2.msra.mxu0 0.0
    %1096 = vmatprep.subr.mxu0 0.0
    %1097 = vmatpush2.msra.mxu0 0.0
    %1098 = vmatprep.subr.mxu0 0.0
    %1099 = vmatpush2.msra.mxu0 0.0
    %1100 = vmatprep.subr.mxu0 0.0
    %1101 = vmatpush2.msra.mxu0 0.0
    %1102 = vmatprep.mubr.f32.mxu0 0.0
    %1103 = vmatmul.mubr.f32.gmra.mxu0 %v1033
    %v1104 = vpop.f32.mrf.mxu0
    %v1105 = vadd.f32 %v1030, %v1104
    %v1106 = vpop.f32.mrf.mxu0
    %1107 = vmatprep.mubr.f32.mxu0 0.0
    %1108 = vmatmul.mubr.f32.gmra.mxu0 %v1036
    %v1109 = vpop.f32.mrf.mxu0
    %v1110 = vadd.f32 %v1030, %v1109
    %v1111 = vpop.f32.mrf.mxu0
    %1112 = vdwg.mxu0
    %v1113 = vadd.f32 %v938, %v1105
    %v1114 = vadd.f32 %v939, %v1110
    %v1115 = vsel %vm134, %v1113, 0.0
    %1116 = vadd.xlane.f32.xlu0 %v1115
    %v1117 = vpop.xlane.xlu0 %1116
    %v1118 = vsel %vm134, %v1114, 0.0
    %1119 = vadd.xlane.f32.xlu0 %v1118
    %v1120 = vpop.xlane.xlu0 %1119
    %v1121 = vmul.f32 %v1117, %v907
    %v1122 = vmul.f32 %v1120, %v907
    %v1123 = vsub.f32 %v1113, %v1121
    %v1124 = vsub.f32 %v1114, %v1122
    %v1125 = vmul.f32 %v1123, %v1123
    %v1126 = vmul.f32 %v1124, %v1124
    %v1127 = vsel %vm134, %v1125, 0.0
    %1128 = vadd.xlane.f32.xlu0 %v1127
    %v1129 = vpop.xlane.xlu0 %1128
    %v1130 = vsel %vm134, %v1126, 0.0
    %1131 = vadd.xlane.f32.xlu0 %v1130
    %v1132 = vpop.xlane.xlu0 %1131
    %v1133 = vmul.f32 %v1129, %v907
    %v1134 = vmul.f32 %v1132, %v907
    %v1135 = vadd.f32 %v1133, 1e-05
    %v1136 = vadd.f32 %v1134, 1e-05
    %v1137 = vrsqrt.pop %v1135
    %v1138 = vrsqrt.pop %v1136
    %v1139 = vmul.f32 %v1123, %v1137
    %v1140 = vmul.f32 %v1124, %v1138
    %v1141 = vlaneseq
    %v1142 = vshrl.u32 %v1141, 7
    %v1143 = vsub.s32 6, %v1142
    %v1144 = vrot.slane %v129, %v1143
    %v1145 = vmul.f32 %v1139, %v1144
    %v1146 = vmul.f32 %v1140, %v1144
    %v1147 = vlaneseq
    %v1148 = vshrl.u32 %v1147, 7
    %v1149 = vsub.s32 7, %v1148
    %v1150 = vrot.slane %v129, %v1149
    %v1151 = vadd.f32 %v1145, %v1150
    %v1152 = vadd.f32 %v1146, %v1150
    %v1153 = vld [vmem:[#allocation7 + $0xe8] sm:$0xff]
    %v1154 = vld [vmem:[#allocation7 + $0xf0] sm:$0xff]
    %v1155 = vld [vmem:[#allocation7 + $0xf8] sm:$0xff]
    %v1156 = vld [vmem:[#allocation7 + $0x100] sm:$0xff]
    %v1157 = vld [vmem:[#allocation7 + $0x108] sm:$0xff]
    %v1158 = vld [vmem:[#allocation7 + $0x110] sm:$0xff]
    %v1159 = vld [vmem:[#allocation7 + $0x118] sm:$0xff]
    %v1160 = vld [vmem:[#allocation7 + $0x120] sm:$0xff]
    %v1161 = vld [vmem:[#allocation7 + $0x128] sm:$0xff]
    %v1162 = vld [vmem:[#allocation7 + $0x130] sm:$0xff]
    %v1163 = vld [vmem:[#allocation7 + $0x138] sm:$0xff]
    %v1164 = vld [vmem:[#allocation7 + $0x140] sm:$0xff]
    %v1165 = vld [vmem:[#allocation7 + $0x148] sm:$0xff]
    %v1166 = vld [vmem:[#allocation7 + $0x150] sm:$0xff]
    %v1167 = vld [vmem:[#allocation7 + $0x158] sm:$0xff]
    %v1168 = vld [vmem:[#allocation7 + $0x160] sm:$0xff]
    %v1169 = vld [vmem:[#allocation7 + $0x190] sm:$0xff]
    %v1170 = vlaneseq
    %v1171 = vshrl.u32 %v1170, 7
    %v1172 = vsub.s32 0, %v1171
    %v1173 = vrot.slane %v1169, %v1172
    %v1175 = vsel %vm134, %v1151, 0
    %v1178 = vsel %vm134, %v1152, 0
    %1180 = vmatprep.subr.mxu0 0.0
    %1181 = vmatpush1.msra.mxu0 0.0
    %1182 = vmatprep.subr.mxu0 0.0
    %1183 = vmatpush1.msra.mxu0 0.0
    %1184 = vmatprep.subr.mxu0 0.0
    %1185 = vmatpush1.msra.mxu0 0.0
    %1186 = vmatprep.subr.mxu0 0.0
    %1187 = vmatpush1.msra.mxu0 0.0
    %1188 = vmatprep.subr.mxu0 0.0
    %1189 = vmatpush1.msra.mxu0 0.0
    %1190 = vmatprep.subr.mxu0 0.0
    %1191 = vmatpush1.msra.mxu0 0.0
    %1192 = vmatprep.subr.mxu0 0.0
    %1193 = vmatpush1.msra.mxu0 0.0
    %1194 = vmatprep.subr.mxu0 0.0
    %1195 = vmatpush1.msra.mxu0 0.0
    %1196 = vmatprep.subr.mxu0 0.0
    %1197 = vmatpush1.msra.mxu0 0.0
    %1198 = vmatprep.subr.mxu0 0.0
    %1199 = vmatpush1.msra.mxu0 0.0
    %1200 = vmatprep.subr.mxu0 0.0
    %1201 = vmatpush1.msra.mxu0 0.0
    %1202 = vmatprep.subr.mxu0 0.0
    %1203 = vmatpush1.msra.mxu0 0.0
    %1204 = vmatprep.subr.mxu0 0.0
    %1205 = vmatpush1.msra.mxu0 %v1156
    %1206 = vmatprep.subr.mxu0 0.0
    %1207 = vmatpush1.msra.mxu0 %v1155
    %1208 = vmatprep.subr.mxu0 0.0
    %1209 = vmatpush1.msra.mxu0 %v1154
    %1210 = vmatprep.subr.mxu0 0.0
    %1211 = vmatpush1.msra.mxu0 %v1153
    %1212 = vmatprep.subr.mxu0 0.0
    %1213 = vmatpush2.msra.mxu0 0.0
    %1214 = vmatprep.subr.mxu0 0.0
    %1215 = vmatpush2.msra.mxu0 0.0
    %1216 = vmatprep.subr.mxu0 0.0
    %1217 = vmatpush2.msra.mxu0 0.0
    %1218 = vmatprep.subr.mxu0 0.0
    %1219 = vmatpush2.msra.mxu0 0.0
    %1220 = vmatprep.subr.mxu0 0.0
    %1221 = vmatpush2.msra.mxu0 0.0
    %1222 = vmatprep.subr.mxu0 0.0
    %1223 = vmatpush2.msra.mxu0 0.0
    %1224 = vmatprep.subr.mxu0 0.0
    %1225 = vmatpush2.msra.mxu0 0.0
    %1226 = vmatprep.subr.mxu0 0.0
    %1227 = vmatpush2.msra.mxu0 0.0
    %1228 = vmatprep.subr.mxu0 0.0
    %1229 = vmatpush2.msra.mxu0 0.0
    %1230 = vmatprep.subr.mxu0 0.0
    %1231 = vmatpush2.msra.mxu0 0.0
    %1232 = vmatprep.subr.mxu0 0.0
    %1233 = vmatpush2.msra.mxu0 0.0
    %1234 = vmatprep.subr.mxu0 0.0
    %1235 = vmatpush2.msra.mxu0 0.0
    %1236 = vmatprep.subr.mxu0 0.0
    %1237 = vmatpush2.msra.mxu0 0.0
    %1238 = vmatprep.subr.mxu0 0.0
    %1239 = vmatpush2.msra.mxu0 0.0
    %1240 = vmatprep.subr.mxu0 0.0
    %1241 = vmatpush2.msra.mxu0 0.0
    %1242 = vmatprep.subr.mxu0 0.0
    %1243 = vmatpush2.msra.mxu0 0.0
    %1244 = vmatprep.mubr.f32.mxu0 0.0
    %1245 = vmatmul.mubr.f32.gmra.mxu0 %v1175
    %v1246 = vpop.f32.mrf.mxu0
    %v1247 = vadd.f32 %v1173, %v1246
    %v1248 = vpop.f32.mrf.mxu0
    %1249 = vmatprep.mubr.f32.mxu0 0.0
    %1250 = vmatmul.mubr.f32.gmra.mxu0 %v1178
    %v1251 = vpop.f32.mrf.mxu0
    %v1252 = vadd.f32 %v1173, %v1251
    %v1253 = vpop.f32.mrf.mxu0
    %1254 = vdwg.mxu0
    %v1255 = vmul.f32 %v1247, %v221
    %v1256 = vmul.f32 %v1247, %v223
    %v1257 = vmul.f32 %v1247, %v225
    %v1258 = vmul.f32 %v1247, %v227
    %v1259 = vmul.f32 %v1247, %v237
    %v1260 = vmul.f32 %v1247, %v239
    %v1261 = vmul.f32 %v1247, %v241
    %v1262 = vmul.f32 %v1247, %v243
    %1267 = vrot.lane.b32.xlu0 %v1255, 96
    %v1268 = vpop.permute.xlu0 %1267
    %1269 = vrot.lane.b32.xlu0 %v1256, 96
    %v1270 = vpop.permute.xlu0 %1269
    %1271 = vrot.lane.b32.xlu0 %v1257, 96
    %v1272 = vpop.permute.xlu0 %1271
    %1273 = vrot.lane.b32.xlu0 %v1258, 96
    %v1274 = vpop.permute.xlu0 %1273
    %v1276 = vsel %vm134, %v1247, 0
    %v1278 = vsel %vm134, %v1268, 0
    %v1280 = vsel %vm134, %v1270, 0
    %v1282 = vsel %vm134, %v1272, 0
    %v1284 = vsel %vm134, %v1274, 0
    %1286 = vmatprep.subr.mxu0 0.0
    %1287 = vmatpush1.xpose.msra.mxu0 0.0
    %1288 = vmatprep.subr.mxu0 0.0
    %1289 = vmatpush1.xpose.msra.mxu0 0.0
    %1290 = vmatprep.subr.mxu0 0.0
    %1291 = vmatpush1.xpose.msra.mxu0 0.0
    %1292 = vmatprep.subr.mxu0 0.0
    %1293 = vmatpush1.xpose.msra.mxu0 0.0
    %1294 = vmatprep.subr.mxu0 0.0
    %1295 = vmatpush1.xpose.msra.mxu0 0.0
    %1296 = vmatprep.subr.mxu0 0.0
    %1297 = vmatpush1.xpose.msra.mxu0 0.0
    %1298 = vmatprep.subr.mxu0 0.0
    %1299 = vmatpush1.xpose.msra.mxu0 0.0
    %1300 = vmatprep.subr.mxu0 0.0
    %1301 = vmatpush1.xpose.msra.mxu0 0.0
    %1302 = vmatprep.subr.mxu0 0.0
    %1303 = vmatpush1.xpose.msra.mxu0 0.0
    %1304 = vmatprep.subr.mxu0 0.0
    %1305 = vmatpush1.xpose.msra.mxu0 0.0
    %1306 = vmatprep.subr.mxu0 0.0
    %1307 = vmatpush1.xpose.msra.mxu0 0.0
    %1308 = vmatprep.subr.mxu0 0.0
    %1309 = vmatpush1.xpose.msra.mxu0 0.0
    %1310 = vmatprep.subr.mxu0 0.0
    %1311 = vmatpush1.xpose.msra.mxu0 %v1284
    %1312 = vmatprep.subr.mxu0 0.0
    %1313 = vmatpush1.xpose.msra.mxu0 %v1282
    %1314 = vmatprep.subr.mxu0 0.0
    %1315 = vmatpush1.xpose.msra.mxu0 %v1280
    %1316 = vmatprep.subr.mxu0 0.0
    %1317 = vmatpush1.xpose.msra.mxu0 %v1278
    %1318 = vmatprep.subr.mxu0 0.0
    %1319 = vmatpush2.xpose.msra.mxu0 0.0
    %1320 = vmatprep.subr.mxu0 0.0
    %1321 = vmatpush2.xpose.msra.mxu0 0.0
    %1322 = vmatprep.subr.mxu0 0.0
    %1323 = vmatpush2.xpose.msra.mxu0 0.0
    %1324 = vmatprep.subr.mxu0 0.0
    %1325 = vmatpush2.xpose.msra.mxu0 0.0
    %1326 = vmatprep.subr.mxu0 0.0
    %1327 = vmatpush2.xpose.msra.mxu0 0.0
    %1328 = vmatprep.subr.mxu0 0.0
    %1329 = vmatpush2.xpose.msra.mxu0 0.0
    %1330 = vmatprep.subr.mxu0 0.0
    %1331 = vmatpush2.xpose.msra.mxu0 0.0
    %1332 = vmatprep.subr.mxu0 0.0
    %1333 = vmatpush2.xpose.msra.mxu0 0.0
    %1334 = vmatprep.subr.mxu0 0.0
    %1335 = vmatpush2.xpose.msra.mxu0 0.0
    %1336 = vmatprep.subr.mxu0 0.0
    %1337 = vmatpush2.xpose.msra.mxu0 0.0
    %1338 = vmatprep.subr.mxu0 0.0
    %1339 = vmatpush2.xpose.msra.mxu0 0.0
    %1340 = vmatprep.subr.mxu0 0.0
    %1341 = vmatpush2.xpose.msra.mxu0 0.0
    %1342 = vmatprep.subr.mxu0 0.0
    %1343 = vmatpush2.xpose.msra.mxu0 0.0
    %1344 = vmatprep.subr.mxu0 0.0
    %1345 = vmatpush2.xpose.msra.mxu0 0.0
    %1346 = vmatprep.subr.mxu0 0.0
    %1347 = vmatpush2.xpose.msra.mxu0 0.0
    %1348 = vmatprep.subr.mxu0 0.0
    %1349 = vmatpush2.xpose.msra.mxu0 0.0
    %1350 = vmatprep.mubr.f32.mxu0 0.0
    %1351 = vmatmul.mubr.f32.gmra.mxu0 %v1276
    %v1352 = vpop.f32.mrf.mxu0
    %v1353 = vadd.f32 0.0, %v1352
    %v1354 = vpop.f32.mrf.mxu0
    %1355 = vdwg.mxu0
    %v1356 = vsel %vm134, %v1353, -inf
    %1357 = vmax.xlane.f32.xlu0 %v1356
    %v1358 = vpop.xlane.xlu0 %1357
    %v1359 = vsub.f32 %v1353, %v1358
    %v1360 = vmul.f32 %v1359, 1.442695
    %v1361 = vpow.pop %v1360
    %v1363 = vsel %vm134, %v1361, 0
    %1365 = vmatprep.subr.mxu0 0.0
    %1366 = vmatpush1.msra.mxu0 0.0
    %1367 = vmatprep.subr.mxu0 0.0
    %1368 = vmatpush1.msra.mxu0 0.0
    %1369 = vmatprep.subr.mxu0 0.0
    %1370 = vmatpush1.msra.mxu0 0.0
    %1371 = vmatprep.subr.mxu0 0.0
    %1372 = vmatpush1.msra.mxu0 0.0
    %1373 = vmatprep.subr.mxu0 0.0
    %1374 = vmatpush1.msra.mxu0 0.0
    %1375 = vmatprep.subr.mxu0 0.0
    %1376 = vmatpush1.msra.mxu0 0.0
    %1377 = vmatprep.subr.mxu0 0.0
    %1378 = vmatpush1.msra.mxu0 0.0
    %1379 = vmatprep.subr.mxu0 0.0
    %1380 = vmatpush1.msra.mxu0 0.0
    %1381 = vmatprep.subr.mxu0 0.0
    %1382 = vmatpush1.msra.mxu0 0.0
    %1383 = vmatprep.subr.mxu0 0.0
    %1384 = vmatpush1.msra.mxu0 0.0
    %1385 = vmatprep.subr.mxu0 0.0
    %1386 = vmatpush1.msra.mxu0 0.0
    %1387 = vmatprep.subr.mxu0 0.0
    %1388 = vmatpush1.msra.mxu0 0.0
    %1389 = vmatprep.subr.mxu0 0.0
    %1390 = vmatpush1.msra.mxu0 %v358
    %1391 = vmatprep.subr.mxu0 0.0
    %1392 = vmatpush1.msra.mxu0 %v356
    %1393 = vmatprep.subr.mxu0 0.0
    %1394 = vmatpush1.msra.mxu0 %v354
    %1395 = vmatprep.subr.mxu0 0.0
    %1396 = vmatpush1.msra.mxu0 %v352
    %1397 = vmatprep.subr.mxu0 0.0
    %1398 = vmatpush2.msra.mxu0 0.0
    %1399 = vmatprep.subr.mxu0 0.0
    %1400 = vmatpush2.msra.mxu0 0.0
    %1401 = vmatprep.subr.mxu0 0.0
    %1402 = vmatpush2.msra.mxu0 0.0
    %1403 = vmatprep.subr.mxu0 0.0
    %1404 = vmatpush2.msra.mxu0 0.0
    %1405 = vmatprep.subr.mxu0 0.0
    %1406 = vmatpush2.msra.mxu0 0.0
    %1407 = vmatprep.subr.mxu0 0.0
    %1408 = vmatpush2.msra.mxu0 0.0
    %1409 = vmatprep.subr.mxu0 0.0
    %1410 = vmatpush2.msra.mxu0 0.0
    %1411 = vmatprep.subr.mxu0 0.0
    %1412 = vmatpush2.msra.mxu0 0.0
    %1413 = vmatprep.subr.mxu0 0.0
    %1414 = vmatpush2.msra.mxu0 0.0
    %1415 = vmatprep.subr.mxu0 0.0
    %1416 = vmatpush2.msra.mxu0 0.0
    %1417 = vmatprep.subr.mxu0 0.0
    %1418 = vmatpush2.msra.mxu0 0.0
    %1419 = vmatprep.subr.mxu0 0.0
    %1420 = vmatpush2.msra.mxu0 0.0
    %1421 = vmatprep.subr.mxu0 0.0
    %1422 = vmatpush2.msra.mxu0 0.0
    %1423 = vmatprep.subr.mxu0 0.0
    %1424 = vmatpush2.msra.mxu0 0.0
    %1425 = vmatprep.subr.mxu0 0.0
    %1426 = vmatpush2.msra.mxu0 0.0
    %1427 = vmatprep.subr.mxu0 0.0
    %1428 = vmatpush2.msra.mxu0 0.0
    %1429 = vmatprep.mubr.f32.mxu0 0.0
    %1430 = vmatmul.mubr.f32.gmra.mxu0 %v1363
    %v1431 = vpop.f32.mrf.mxu0
    %v1432 = vadd.f32 0.0, %v1431
    %v1433 = vpop.f32.mrf.mxu0
    %1434 = vdwg.mxu0
    %v1435 = vrcp.pop %v1432
    %v1436 = vmul.f32 %v1361, %v1435
    %1441 = vrot.lane.b32.xlu0 %v1259, 64
    %v1442 = vpop.permute.xlu0 %1441
    %1443 = vrot.lane.b32.xlu0 %v1260, 64
    %v1444 = vpop.permute.xlu0 %1443
    %1445 = vrot.lane.b32.xlu0 %v1261, 64
    %v1446 = vpop.permute.xlu0 %1445
    %1447 = vrot.lane.b32.xlu0 %v1262, 64
    %v1448 = vpop.permute.xlu0 %1447
    %v1454 = vsel %vm134, %v1436, 0
    %1456 = vmatprep.subr.mxu0 0.0
    %1457 = vmatpush1.msra.mxu0 0.0
    %1458 = vmatprep.subr.mxu0 0.0
    %1459 = vmatpush1.msra.mxu0 0.0
    %1460 = vmatprep.subr.mxu0 0.0
    %1461 = vmatpush1.msra.mxu0 0.0
    %1462 = vmatprep.subr.mxu0 0.0
    %1463 = vmatpush1.msra.mxu0 0.0
    %1464 = vmatprep.subr.mxu0 0.0
    %1465 = vmatpush1.msra.mxu0 0.0
    %1466 = vmatprep.subr.mxu0 0.0
    %1467 = vmatpush1.msra.mxu0 0.0
    %1468 = vmatprep.subr.mxu0 0.0
    %1469 = vmatpush1.msra.mxu0 0.0
    %1470 = vmatprep.subr.mxu0 0.0
    %1471 = vmatpush1.msra.mxu0 0.0
    %1472 = vmatprep.subr.mxu0 0.0
    %1473 = vmatpush1.msra.mxu0 0.0
    %1474 = vmatprep.subr.mxu0 0.0
    %1475 = vmatpush1.msra.mxu0 0.0
    %1476 = vmatprep.subr.mxu0 0.0
    %1477 = vmatpush1.msra.mxu0 0.0
    %1478 = vmatprep.subr.mxu0 0.0
    %1479 = vmatpush1.msra.mxu0 0.0
    %1480 = vmatprep.subr.mxu0 0.0
    %1481 = vmatpush1.msra.mxu0 %v1448
    %1482 = vmatprep.subr.mxu0 0.0
    %1483 = vmatpush1.msra.mxu0 %v1446
    %1484 = vmatprep.subr.mxu0 0.0
    %1485 = vmatpush1.msra.mxu0 %v1444
    %1486 = vmatprep.subr.mxu0 0.0
    %1487 = vmatpush1.msra.mxu0 %v1442
    %1488 = vmatprep.subr.mxu0 0.0
    %1489 = vmatpush2.msra.mxu0 0.0
    %1490 = vmatprep.subr.mxu0 0.0
    %1491 = vmatpush2.msra.mxu0 0.0
    %1492 = vmatprep.subr.mxu0 0.0
    %1493 = vmatpush2.msra.mxu0 0.0
    %1494 = vmatprep.subr.mxu0 0.0
    %1495 = vmatpush2.msra.mxu0 0.0
    %1496 = vmatprep.subr.mxu0 0.0
    %1497 = vmatpush2.msra.mxu0 0.0
    %1498 = vmatprep.subr.mxu0 0.0
    %1499 = vmatpush2.msra.mxu0 0.0
    %1500 = vmatprep.subr.mxu0 0.0
    %1501 = vmatpush2.msra.mxu0 0.0
    %1502 = vmatprep.subr.mxu0 0.0
    %1503 = vmatpush2.msra.mxu0 0.0
    %1504 = vmatprep.subr.mxu0 0.0
    %1505 = vmatpush2.msra.mxu0 0.0
    %1506 = vmatprep.subr.mxu0 0.0
    %1507 = vmatpush2.msra.mxu0 0.0
    %1508 = vmatprep.subr.mxu0 0.0
    %1509 = vmatpush2.msra.mxu0 0.0
    %1510 = vmatprep.subr.mxu0 0.0
    %1511 = vmatpush2.msra.mxu0 0.0
    %1512 = vmatprep.subr.mxu0 0.0
    %1513 = vmatpush2.msra.mxu0 0.0
    %1514 = vmatprep.subr.mxu0 0.0
    %1515 = vmatpush2.msra.mxu0 0.0
    %1516 = vmatprep.subr.mxu0 0.0
    %1517 = vmatpush2.msra.mxu0 0.0
    %1518 = vmatprep.subr.mxu0 0.0
    %1519 = vmatpush2.msra.mxu0 0.0
    %1520 = vmatprep.mubr.f32.mxu0 0.0
    %1521 = vmatmul.mubr.f32.gmra.mxu0 %v1454
    %v1522 = vpop.f32.mrf.mxu0
    %v1523 = vadd.f32 0.0, %v1522
    %v1524 = vpop.f32.mrf.mxu0
    %1525 = vdwg.mxu0
    %v1526 = vmul.f32 %v1252, %v221
    %v1527 = vmul.f32 %v1252, %v223
    %v1528 = vmul.f32 %v1252, %v225
    %v1529 = vmul.f32 %v1252, %v227
    %v1530 = vmul.f32 %v1252, %v237
    %v1531 = vmul.f32 %v1252, %v239
    %v1532 = vmul.f32 %v1252, %v241
    %v1533 = vmul.f32 %v1252, %v243
    %1538 = vrot.lane.b32.xlu0 %v1526, 96
    %v1539 = vpop.permute.xlu0 %1538
    %1540 = vrot.lane.b32.xlu0 %v1527, 96
    %v1541 = vpop.permute.xlu0 %1540
    %1542 = vrot.lane.b32.xlu0 %v1528, 96
    %v1543 = vpop.permute.xlu0 %1542
    %1544 = vrot.lane.b32.xlu0 %v1529, 96
    %v1545 = vpop.permute.xlu0 %1544
    %v1547 = vsel %vm134, %v1252, 0
    %v1549 = vsel %vm134, %v1539, 0
    %v1551 = vsel %vm134, %v1541, 0
    %v1553 = vsel %vm134, %v1543, 0
    %v1555 = vsel %vm134, %v1545, 0
    %1557 = vmatprep.subr.mxu0 0.0
    %1558 = vmatpush1.xpose.msra.mxu0 0.0
    %1559 = vmatprep.subr.mxu0 0.0
    %1560 = vmatpush1.xpose.msra.mxu0 0.0
    %1561 = vmatprep.subr.mxu0 0.0
    %1562 = vmatpush1.xpose.msra.mxu0 0.0
    %1563 = vmatprep.subr.mxu0 0.0
    %1564 = vmatpush1.xpose.msra.mxu0 0.0
    %1565 = vmatprep.subr.mxu0 0.0
    %1566 = vmatpush1.xpose.msra.mxu0 0.0
    %1567 = vmatprep.subr.mxu0 0.0
    %1568 = vmatpush1.xpose.msra.mxu0 0.0
    %1569 = vmatprep.subr.mxu0 0.0
    %1570 = vmatpush1.xpose.msra.mxu0 0.0
    %1571 = vmatprep.subr.mxu0 0.0
    %1572 = vmatpush1.xpose.msra.mxu0 0.0
    %1573 = vmatprep.subr.mxu0 0.0
    %1574 = vmatpush1.xpose.msra.mxu0 0.0
    %1575 = vmatprep.subr.mxu0 0.0
    %1576 = vmatpush1.xpose.msra.mxu0 0.0
    %1577 = vmatprep.subr.mxu0 0.0
    %1578 = vmatpush1.xpose.msra.mxu0 0.0
    %1579 = vmatprep.subr.mxu0 0.0
    %1580 = vmatpush1.xpose.msra.mxu0 0.0
    %1581 = vmatprep.subr.mxu0 0.0
    %1582 = vmatpush1.xpose.msra.mxu0 %v1555
    %1583 = vmatprep.subr.mxu0 0.0
    %1584 = vmatpush1.xpose.msra.mxu0 %v1553
    %1585 = vmatprep.subr.mxu0 0.0
    %1586 = vmatpush1.xpose.msra.mxu0 %v1551
    %1587 = vmatprep.subr.mxu0 0.0
    %1588 = vmatpush1.xpose.msra.mxu0 %v1549
    %1589 = vmatprep.subr.mxu0 0.0
    %1590 = vmatpush2.xpose.msra.mxu0 0.0
    %1591 = vmatprep.subr.mxu0 0.0
    %1592 = vmatpush2.xpose.msra.mxu0 0.0
    %1593 = vmatprep.subr.mxu0 0.0
    %1594 = vmatpush2.xpose.msra.mxu0 0.0
    %1595 = vmatprep.subr.mxu0 0.0
    %1596 = vmatpush2.xpose.msra.mxu0 0.0
    %1597 = vmatprep.subr.mxu0 0.0
    %1598 = vmatpush2.xpose.msra.mxu0 0.0
    %1599 = vmatprep.subr.mxu0 0.0
    %1600 = vmatpush2.xpose.msra.mxu0 0.0
    %1601 = vmatprep.subr.mxu0 0.0
    %1602 = vmatpush2.xpose.msra.mxu0 0.0
    %1603 = vmatprep.subr.mxu0 0.0
    %1604 = vmatpush2.xpose.msra.mxu0 0.0
    %1605 = vmatprep.subr.mxu0 0.0
    %1606 = vmatpush2.xpose.msra.mxu0 0.0
    %1607 = vmatprep.subr.mxu0 0.0
    %1608 = vmatpush2.xpose.msra.mxu0 0.0
    %1609 = vmatprep.subr.mxu0 0.0
    %1610 = vmatpush2.xpose.msra.mxu0 0.0
    %1611 = vmatprep.subr.mxu0 0.0
    %1612 = vmatpush2.xpose.msra.mxu0 0.0
    %1613 = vmatprep.subr.mxu0 0.0
    %1614 = vmatpush2.xpose.msra.mxu0 0.0
    %1615 = vmatprep.subr.mxu0 0.0
    %1616 = vmatpush2.xpose.msra.mxu0 0.0
    %1617 = vmatprep.subr.mxu0 0.0
    %1618 = vmatpush2.xpose.msra.mxu0 0.0
    %1619 = vmatprep.subr.mxu0 0.0
    %1620 = vmatpush2.xpose.msra.mxu0 0.0
    %1621 = vmatprep.mubr.f32.mxu0 0.0
    %1622 = vmatmul.mubr.f32.gmra.mxu0 %v1547
    %v1623 = vpop.f32.mrf.mxu0
    %v1624 = vadd.f32 0.0, %v1623
    %v1625 = vpop.f32.mrf.mxu0
    %1626 = vdwg.mxu0
    %v1627 = vsel %vm134, %v1624, -inf
    %1628 = vmax.xlane.f32.xlu0 %v1627
    %v1629 = vpop.xlane.xlu0 %1628
    %v1630 = vsub.f32 %v1624, %v1629
    %v1631 = vmul.f32 %v1630, 1.442695
    %v1632 = vpow.pop %v1631
    %v1634 = vsel %vm134, %v1632, 0
    %1636 = vmatprep.subr.mxu0 0.0
    %1637 = vmatpush1.msra.mxu0 0.0
    %1638 = vmatprep.subr.mxu0 0.0
    %1639 = vmatpush1.msra.mxu0 0.0
    %1640 = vmatprep.subr.mxu0 0.0
    %1641 = vmatpush1.msra.mxu0 0.0
    %1642 = vmatprep.subr.mxu0 0.0
    %1643 = vmatpush1.msra.mxu0 0.0
    %1644 = vmatprep.subr.mxu0 0.0
    %1645 = vmatpush1.msra.mxu0 0.0
    %1646 = vmatprep.subr.mxu0 0.0
    %1647 = vmatpush1.msra.mxu0 0.0
    %1648 = vmatprep.subr.mxu0 0.0
    %1649 = vmatpush1.msra.mxu0 0.0
    %1650 = vmatprep.subr.mxu0 0.0
    %1651 = vmatpush1.msra.mxu0 0.0
    %1652 = vmatprep.subr.mxu0 0.0
    %1653 = vmatpush1.msra.mxu0 0.0
    %1654 = vmatprep.subr.mxu0 0.0
    %1655 = vmatpush1.msra.mxu0 0.0
    %1656 = vmatprep.subr.mxu0 0.0
    %1657 = vmatpush1.msra.mxu0 0.0
    %1658 = vmatprep.subr.mxu0 0.0
    %1659 = vmatpush1.msra.mxu0 0.0
    %1660 = vmatprep.subr.mxu0 0.0
    %1661 = vmatpush1.msra.mxu0 %v358
    %1662 = vmatprep.subr.mxu0 0.0
    %1663 = vmatpush1.msra.mxu0 %v356
    %1664 = vmatprep.subr.mxu0 0.0
    %1665 = vmatpush1.msra.mxu0 %v354
    %1666 = vmatprep.subr.mxu0 0.0
    %1667 = vmatpush1.msra.mxu0 %v352
    %1668 = vmatprep.subr.mxu0 0.0
    %1669 = vmatpush2.msra.mxu0 0.0
    %1670 = vmatprep.subr.mxu0 0.0
    %1671 = vmatpush2.msra.mxu0 0.0
    %1672 = vmatprep.subr.mxu0 0.0
    %1673 = vmatpush2.msra.mxu0 0.0
    %1674 = vmatprep.subr.mxu0 0.0
    %1675 = vmatpush2.msra.mxu0 0.0
    %1676 = vmatprep.subr.mxu0 0.0
    %1677 = vmatpush2.msra.mxu0 0.0
    %1678 = vmatprep.subr.mxu0 0.0
    %1679 = vmatpush2.msra.mxu0 0.0
    %1680 = vmatprep.subr.mxu0 0.0
    %1681 = vmatpush2.msra.mxu0 0.0
    %1682 = vmatprep.subr.mxu0 0.0
    %1683 = vmatpush2.msra.mxu0 0.0
    %1684 = vmatprep.subr.mxu0 0.0
    %1685 = vmatpush2.msra.mxu0 0.0
    %1686 = vmatprep.subr.mxu0 0.0
    %1687 = vmatpush2.msra.mxu0 0.0
    %1688 = vmatprep.subr.mxu0 0.0
    %1689 = vmatpush2.msra.mxu0 0.0
    %1690 = vmatprep.subr.mxu0 0.0
    %1691 = vmatpush2.msra.mxu0 0.0
    %1692 = vmatprep.subr.mxu0 0.0
    %1693 = vmatpush2.msra.mxu0 0.0
    %1694 = vmatprep.subr.mxu0 0.0
    %1695 = vmatpush2.msra.mxu0 0.0
    %1696 = vmatprep.subr.mxu0 0.0
    %1697 = vmatpush2.msra.mxu0 0.0
    %1698 = vmatprep.subr.mxu0 0.0
    %1699 = vmatpush2.msra.mxu0 0.0
    %1700 = vmatprep.mubr.f32.mxu0 0.0
    %1701 = vmatmul.mubr.f32.gmra.mxu0 %v1634
    %v1702 = vpop.f32.mrf.mxu0
    %v1703 = vadd.f32 0.0, %v1702
    %v1704 = vpop.f32.mrf.mxu0
    %1705 = vdwg.mxu0
    %v1706 = vrcp.pop %v1703
    %v1707 = vmul.f32 %v1632, %v1706
    %1712 = vrot.lane.b32.xlu0 %v1530, 64
    %v1713 = vpop.permute.xlu0 %1712
    %1714 = vrot.lane.b32.xlu0 %v1531, 64
    %v1715 = vpop.permute.xlu0 %1714
    %1716 = vrot.lane.b32.xlu0 %v1532, 64
    %v1717 = vpop.permute.xlu0 %1716
    %1718 = vrot.lane.b32.xlu0 %v1533, 64
    %v1719 = vpop.permute.xlu0 %1718
    %v1725 = vsel %vm134, %v1707, 0
    %1727 = vmatprep.subr.mxu0 0.0
    %1728 = vmatpush1.msra.mxu0 0.0
    %1729 = vmatprep.subr.mxu0 0.0
    %1730 = vmatpush1.msra.mxu0 0.0
    %1731 = vmatprep.subr.mxu0 0.0
    %1732 = vmatpush1.msra.mxu0 0.0
    %1733 = vmatprep.subr.mxu0 0.0
    %1734 = vmatpush1.msra.mxu0 0.0
    %1735 = vmatprep.subr.mxu0 0.0
    %1736 = vmatpush1.msra.mxu0 0.0
    %1737 = vmatprep.subr.mxu0 0.0
    %1738 = vmatpush1.msra.mxu0 0.0
    %1739 = vmatprep.subr.mxu0 0.0
    %1740 = vmatpush1.msra.mxu0 0.0
    %1741 = vmatprep.subr.mxu0 0.0
    %1742 = vmatpush1.msra.mxu0 0.0
    %1743 = vmatprep.subr.mxu0 0.0
    %1744 = vmatpush1.msra.mxu0 0.0
    %1745 = vmatprep.subr.mxu0 0.0
    %1746 = vmatpush1.msra.mxu0 0.0
    %1747 = vmatprep.subr.mxu0 0.0
    %1748 = vmatpush1.msra.mxu0 0.0
    %1749 = vmatprep.subr.mxu0 0.0
    %1750 = vmatpush1.msra.mxu0 0.0
    %1751 = vmatprep.subr.mxu0 0.0
    %1752 = vmatpush1.msra.mxu0 %v1719
    %1753 = vmatprep.subr.mxu0 0.0
    %1754 = vmatpush1.msra.mxu0 %v1717
    %1755 = vmatprep.subr.mxu0 0.0
    %1756 = vmatpush1.msra.mxu0 %v1715
    %1757 = vmatprep.subr.mxu0 0.0
    %1758 = vmatpush1.msra.mxu0 %v1713
    %1759 = vmatprep.subr.mxu0 0.0
    %1760 = vmatpush2.msra.mxu0 0.0
    %1761 = vmatprep.subr.mxu0 0.0
    %1762 = vmatpush2.msra.mxu0 0.0
    %1763 = vmatprep.subr.mxu0 0.0
    %1764 = vmatpush2.msra.mxu0 0.0
    %1765 = vmatprep.subr.mxu0 0.0
    %1766 = vmatpush2.msra.mxu0 0.0
    %1767 = vmatprep.subr.mxu0 0.0
    %1768 = vmatpush2.msra.mxu0 0.0
    %1769 = vmatprep.subr.mxu0 0.0
    %1770 = vmatpush2.msra.mxu0 0.0
    %1771 = vmatprep.subr.mxu0 0.0
    %1772 = vmatpush2.msra.mxu0 0.0
    %1773 = vmatprep.subr.mxu0 0.0
    %1774 = vmatpush2.msra.mxu0 0.0
    %1775 = vmatprep.subr.mxu0 0.0
    %1776 = vmatpush2.msra.mxu0 0.0
    %1777 = vmatprep.subr.mxu0 0.0
    %1778 = vmatpush2.msra.mxu0 0.0
    %1779 = vmatprep.subr.mxu0 0.0
    %1780 = vmatpush2.msra.mxu0 0.0
    %1781 = vmatprep.subr.mxu0 0.0
    %1782 = vmatpush2.msra.mxu0 0.0
    %1783 = vmatprep.subr.mxu0 0.0
    %1784 = vmatpush2.msra.mxu0 0.0
    %1785 = vmatprep.subr.mxu0 0.0
    %1786 = vmatpush2.msra.mxu0 0.0
    %1787 = vmatprep.subr.mxu0 0.0
    %1788 = vmatpush2.msra.mxu0 0.0
    %1789 = vmatprep.subr.mxu0 0.0
    %1790 = vmatpush2.msra.mxu0 0.0
    %1791 = vmatprep.mubr.f32.mxu0 0.0
    %1792 = vmatmul.mubr.f32.gmra.mxu0 %v1725
    %v1793 = vpop.f32.mrf.mxu0
    %v1794 = vadd.f32 0.0, %v1793
    %v1795 = vpop.f32.mrf.mxu0
    %1796 = vdwg.mxu0
    %v1797 = vlaneseq
    %v1798 = vshrl.u32 %v1797, 7
    %v1799 = vsub.s32 1, %v1798
    %v1800 = vrot.slane %v1169, %v1799
    %1805 = vrot.lane.b32.xlu0 %v1153, 32
    %v1806 = vpop.permute.xlu0 %1805
    %1807 = vrot.lane.b32.xlu0 %v1154, 32
    %v1808 = vpop.permute.xlu0 %1807
    %1809 = vrot.lane.b32.xlu0 %v1155, 32
    %v1810 = vpop.permute.xlu0 %1809
    %1811 = vrot.lane.b32.xlu0 %v1156, 32
    %v1812 = vpop.permute.xlu0 %1811
    %v1818 = vsel %vm134, %v1523, 0
    %v1821 = vsel %vm134, %v1794, 0
    %1823 = vmatprep.subr.mxu0 0.0
    %1824 = vmatpush1.msra.mxu0 0.0
    %1825 = vmatprep.subr.mxu0 0.0
    %1826 = vmatpush1.msra.mxu0 0.0
    %1827 = vmatprep.subr.mxu0 0.0
    %1828 = vmatpush1.msra.mxu0 0.0
    %1829 = vmatprep.subr.mxu0 0.0
    %1830 = vmatpush1.msra.mxu0 0.0
    %1831 = vmatprep.subr.mxu0 0.0
    %1832 = vmatpush1.msra.mxu0 0.0
    %1833 = vmatprep.subr.mxu0 0.0
    %1834 = vmatpush1.msra.mxu0 0.0
    %1835 = vmatprep.subr.mxu0 0.0
    %1836 = vmatpush1.msra.mxu0 0.0
    %1837 = vmatprep.subr.mxu0 0.0
    %1838 = vmatpush1.msra.mxu0 0.0
    %1839 = vmatprep.subr.mxu0 0.0
    %1840 = vmatpush1.msra.mxu0 0.0
    %1841 = vmatprep.subr.mxu0 0.0
    %1842 = vmatpush1.msra.mxu0 0.0
    %1843 = vmatprep.subr.mxu0 0.0
    %1844 = vmatpush1.msra.mxu0 0.0
    %1845 = vmatprep.subr.mxu0 0.0
    %1846 = vmatpush1.msra.mxu0 0.0
    %1847 = vmatprep.subr.mxu0 0.0
    %1848 = vmatpush1.msra.mxu0 %v1812
    %1849 = vmatprep.subr.mxu0 0.0
    %1850 = vmatpush1.msra.mxu0 %v1810
    %1851 = vmatprep.subr.mxu0 0.0
    %1852 = vmatpush1.msra.mxu0 %v1808
    %1853 = vmatprep.subr.mxu0 0.0
    %1854 = vmatpush1.msra.mxu0 %v1806
    %1855 = vmatprep.subr.mxu0 0.0
    %1856 = vmatpush2.msra.mxu0 0.0
    %1857 = vmatprep.subr.mxu0 0.0
    %1858 = vmatpush2.msra.mxu0 0.0
    %1859 = vmatprep.subr.mxu0 0.0
    %1860 = vmatpush2.msra.mxu0 0.0
    %1861 = vmatprep.subr.mxu0 0.0
    %1862 = vmatpush2.msra.mxu0 0.0
    %1863 = vmatprep.subr.mxu0 0.0
    %1864 = vmatpush2.msra.mxu0 0.0
    %1865 = vmatprep.subr.mxu0 0.0
    %1866 = vmatpush2.msra.mxu0 0.0
    %1867 = vmatprep.subr.mxu0 0.0
    %1868 = vmatpush2.msra.mxu0 0.0
    %1869 = vmatprep.subr.mxu0 0.0
    %1870 = vmatpush2.msra.mxu0 0.0
    %1871 = vmatprep.subr.mxu0 0.0
    %1872 = vmatpush2.msra.mxu0 0.0
    %1873 = vmatprep.subr.mxu0 0.0
    %1874 = vmatpush2.msra.mxu0 0.0
    %1875 = vmatprep.subr.mxu0 0.0
    %1876 = vmatpush2.msra.mxu0 0.0
    %1877 = vmatprep.subr.mxu0 0.0
    %1878 = vmatpush2.msra.mxu0 0.0
    %1879 = vmatprep.subr.mxu0 0.0
    %1880 = vmatpush2.msra.mxu0 0.0
    %1881 = vmatprep.subr.mxu0 0.0
    %1882 = vmatpush2.msra.mxu0 0.0
    %1883 = vmatprep.subr.mxu0 0.0
    %1884 = vmatpush2.msra.mxu0 0.0
    %1885 = vmatprep.subr.mxu0 0.0
    %1886 = vmatpush2.msra.mxu0 0.0
    %1887 = vmatprep.mubr.f32.mxu0 0.0
    %1888 = vmatmul.mubr.f32.gmra.mxu0 %v1818
    %v1889 = vpop.f32.mrf.mxu0
    %v1890 = vadd.f32 %v1800, %v1889
    %v1891 = vpop.f32.mrf.mxu0
    %1892 = vmatprep.mubr.f32.mxu0 0.0
    %1893 = vmatmul.mubr.f32.gmra.mxu0 %v1821
    %v1894 = vpop.f32.mrf.mxu0
    %v1895 = vadd.f32 %v1800, %v1894
    %v1896 = vpop.f32.mrf.mxu0
    %1897 = vdwg.mxu0
    %v1898 = vadd.f32 %v1151, %v1890
    %v1899 = vadd.f32 %v1152, %v1895
    %v1900 = vsel %vm134, %v1898, 0.0
    %1901 = vadd.xlane.f32.xlu0 %v1900
    %v1902 = vpop.xlane.xlu0 %1901
    %v1903 = vsel %vm134, %v1899, 0.0
    %1904 = vadd.xlane.f32.xlu0 %v1903
    %v1905 = vpop.xlane.xlu0 %1904
    %v1906 = vmul.f32 %v1902, %v907
    %v1907 = vmul.f32 %v1905, %v907
    %v1908 = vsub.f32 %v1898, %v1906
    %v1909 = vsub.f32 %v1899, %v1907
    %v1910 = vmul.f32 %v1908, %v1908
    %v1911 = vmul.f32 %v1909, %v1909
    %v1912 = vsel %vm134, %v1910, 0.0
    %1913 = vadd.xlane.f32.xlu0 %v1912
    %v1914 = vpop.xlane.xlu0 %1913
    %v1915 = vsel %vm134, %v1911, 0.0
    %1916 = vadd.xlane.f32.xlu0 %v1915
    %v1917 = vpop.xlane.xlu0 %1916
    %v1918 = vmul.f32 %v1914, %v907
    %v1919 = vmul.f32 %v1917, %v907
    %v1920 = vadd.f32 %v1918, 1e-05
    %v1921 = vadd.f32 %v1919, 1e-05
    %v1922 = vrsqrt.pop %v1920
    %v1923 = vrsqrt.pop %v1921
    %v1924 = vmul.f32 %v1908, %v1922
    %v1925 = vmul.f32 %v1909, %v1923
    %v1926 = vlaneseq
    %v1927 = vshrl.u32 %v1926, 7
    %v1928 = vsub.s32 4, %v1927
    %v1929 = vrot.slane %v1169, %v1928
    %v1930 = vmul.f32 %v1924, %v1929
    %v1931 = vmul.f32 %v1925, %v1929
    %v1932 = vlaneseq
    %v1933 = vshrl.u32 %v1932, 7
    %v1934 = vsub.s32 5, %v1933
    %v1935 = vrot.slane %v1169, %v1934
    %v1936 = vadd.f32 %v1930, %v1935
    %v1937 = vadd.f32 %v1931, %v1935
    %v1938 = vlaneseq
    %v1939 = vshrl.u32 %v1938, 7
    %v1940 = vsub.s32 2, %v1939
    %v1941 = vrot.slane %v1169, %v1940
    %v1943 = vsel %vm134, %v1936, 0
    %v1946 = vsel %vm134, %v1937, 0
    %1948 = vmatprep.subr.mxu0 0.0
    %1949 = vmatpush1.msra.mxu0 0.0
    %1950 = vmatprep.subr.mxu0 0.0
    %1951 = vmatpush1.msra.mxu0 0.0
    %1952 = vmatprep.subr.mxu0 0.0
    %1953 = vmatpush1.msra.mxu0 0.0
    %1954 = vmatprep.subr.mxu0 0.0
    %1955 = vmatpush1.msra.mxu0 0.0
    %1956 = vmatprep.subr.mxu0 0.0
    %1957 = vmatpush1.msra.mxu0 0.0
    %1958 = vmatprep.subr.mxu0 0.0
    %1959 = vmatpush1.msra.mxu0 0.0
    %1960 = vmatprep.subr.mxu0 0.0
    %1961 = vmatpush1.msra.mxu0 0.0
    %1962 = vmatprep.subr.mxu0 0.0
    %1963 = vmatpush1.msra.mxu0 0.0
    %1964 = vmatprep.subr.mxu0 0.0
    %1965 = vmatpush1.msra.mxu0 0.0
    %1966 = vmatprep.subr.mxu0 0.0
    %1967 = vmatpush1.msra.mxu0 0.0
    %1968 = vmatprep.subr.mxu0 0.0
    %1969 = vmatpush1.msra.mxu0 0.0
    %1970 = vmatprep.subr.mxu0 0.0
    %1971 = vmatpush1.msra.mxu0 0.0
    %1972 = vmatprep.subr.mxu0 0.0
    %1973 = vmatpush1.msra.mxu0 %v1160
    %1974 = vmatprep.subr.mxu0 0.0
    %1975 = vmatpush1.msra.mxu0 %v1159
    %1976 = vmatprep.subr.mxu0 0.0
    %1977 = vmatpush1.msra.mxu0 %v1158
    %1978 = vmatprep.subr.mxu0 0.0
    %1979 = vmatpush1.msra.mxu0 %v1157
    %1980 = vmatprep.subr.mxu0 0.0
    %1981 = vmatpush2.msra.mxu0 0.0
    %1982 = vmatprep.subr.mxu0 0.0
    %1983 = vmatpush2.msra.mxu0 0.0
    %1984 = vmatprep.subr.mxu0 0.0
    %1985 = vmatpush2.msra.mxu0 0.0
    %1986 = vmatprep.subr.mxu0 0.0
    %1987 = vmatpush2.msra.mxu0 0.0
    %1988 = vmatprep.subr.mxu0 0.0
    %1989 = vmatpush2.msra.mxu0 0.0
    %1990 = vmatprep.subr.mxu0 0.0
    %1991 = vmatpush2.msra.mxu0 0.0
    %1992 = vmatprep.subr.mxu0 0.0
    %1993 = vmatpush2.msra.mxu0 0.0
    %1994 = vmatprep.subr.mxu0 0.0
    %1995 = vmatpush2.msra.mxu0 0.0
    %1996 = vmatprep.subr.mxu0 0.0
    %1997 = vmatpush2.msra.mxu0 0.0
    %1998 = vmatprep.subr.mxu0 0.0
    %1999 = vmatpush2.msra.mxu0 0.0
    %2000 = vmatprep.subr.mxu0 0.0
    %2001 = vmatpush2.msra.mxu0 0.0
    %2002 = vmatprep.subr.mxu0 0.0
    %2003 = vmatpush2.msra.mxu0 0.0
    %2004 = vmatprep.subr.mxu0 0.0
    %2005 = vmatpush2.msra.mxu0 0.0
    %2006 = vmatprep.subr.mxu0 0.0
    %2007 = vmatpush2.msra.mxu0 0.0
    %2008 = vmatprep.subr.mxu0 0.0
    %2009 = vmatpush2.msra.mxu0 0.0
    %2010 = vmatprep.subr.mxu0 0.0
    %2011 = vmatpush2.msra.mxu0 0.0
    %2012 = vmatprep.mubr.f32.mxu0 0.0
    %2013 = vmatmul.mubr.f32.gmra.mxu0 %v1943
    %v2014 = vpop.f32.mrf.mxu0
    %v2015 = vadd.f32 %v1941, %v2014
    %v2016 = vpop.f32.mrf.mxu0
    %2017 = vmatprep.mubr.f32.mxu0 0.0
    %2018 = vmatmul.mubr.f32.gmra.mxu0 %v1946
    %v2019 = vpop.f32.mrf.mxu0
    %v2020 = vadd.f32 %v1941, %v2019
    %v2021 = vpop.f32.mrf.mxu0
    %2022 = vdwg.mxu0
    %v2023 = vmax.f32 %v2015, 0.0
    %v2024 = vmax.f32 %v2020, 0.0
    %v2025 = vlaneseq
    %v2026 = vshrl.u32 %v2025, 7
    %v2027 = vsub.s32 3, %v2026
    %v2028 = vrot.slane %v1169, %v2027
    %v2030 = vsel %vm1031, %v2023, 0
    %v2033 = vsel %vm1031, %v2024, 0
    %2035 = vmatprep.subr.mxu0 0.0
    %2036 = vmatpush1.msra.mxu0 0.0
    %2037 = vmatprep.subr.mxu0 0.0
    %2038 = vmatpush1.msra.mxu0 0.0
    %2039 = vmatprep.subr.mxu0 0.0
    %2040 = vmatpush1.msra.mxu0 0.0
    %2041 = vmatprep.subr.mxu0 0.0
    %2042 = vmatpush1.msra.mxu0 0.0
    %2043 = vmatprep.subr.mxu0 0.0
    %2044 = vmatpush1.msra.mxu0 0.0
    %2045 = vmatprep.subr.mxu0 0.0
    %2046 = vmatpush1.msra.mxu0 0.0
    %2047 = vmatprep.subr.mxu0 0.0
    %2048 = vmatpush1.msra.mxu0 0.0
    %2049 = vmatprep.subr.mxu0 0.0
    %2050 = vmatpush1.msra.mxu0 0.0
    %2051 = vmatprep.subr.mxu0 0.0
    %2052 = vmatpush1.msra.mxu0 %v1168
    %2053 = vmatprep.subr.mxu0 0.0
    %2054 = vmatpush1.msra.mxu0 %v1167
    %2055 = vmatprep.subr.mxu0 0.0
    %2056 = vmatpush1.msra.mxu0 %v1166
    %2057 = vmatprep.subr.mxu0 0.0
    %2058 = vmatpush1.msra.mxu0 %v1165
    %2059 = vmatprep.subr.mxu0 0.0
    %2060 = vmatpush1.msra.mxu0 %v1164
    %2061 = vmatprep.subr.mxu0 0.0
    %2062 = vmatpush1.msra.mxu0 %v1163
    %2063 = vmatprep.subr.mxu0 0.0
    %2064 = vmatpush1.msra.mxu0 %v1162
    %2065 = vmatprep.subr.mxu0 0.0
    %2066 = vmatpush1.msra.mxu0 %v1161
    %2067 = vmatprep.subr.mxu0 0.0
    %2068 = vmatpush2.msra.mxu0 0.0
    %2069 = vmatprep.subr.mxu0 0.0
    %2070 = vmatpush2.msra.mxu0 0.0
    %2071 = vmatprep.subr.mxu0 0.0
    %2072 = vmatpush2.msra.mxu0 0.0
    %2073 = vmatprep.subr.mxu0 0.0
    %2074 = vmatpush2.msra.mxu0 0.0
    %2075 = vmatprep.subr.mxu0 0.0
    %2076 = vmatpush2.msra.mxu0 0.0
    %2077 = vmatprep.subr.mxu0 0.0
    %2078 = vmatpush2.msra.mxu0 0.0
    %2079 = vmatprep.subr.mxu0 0.0
    %2080 = vmatpush2.msra.mxu0 0.0
    %2081 = vmatprep.subr.mxu0 0.0
    %2082 = vmatpush2.msra.mxu0 0.0
    %2083 = vmatprep.subr.mxu0 0.0
    %2084 = vmatpush2.msra.mxu0 0.0
    %2085 = vmatprep.subr.mxu0 0.0
    %2086 = vmatpush2.msra.mxu0 0.0
    %2087 = vmatprep.subr.mxu0 0.0
    %2088 = vmatpush2.msra.mxu0 0.0
    %2089 = vmatprep.subr.mxu0 0.0
    %2090 = vmatpush2.msra.mxu0 0.0
    %2091 = vmatprep.subr.mxu0 0.0
    %2092 = vmatpush2.msra.mxu0 0.0
    %2093 = vmatprep.subr.mxu0 0.0
    %2094 = vmatpush2.msra.mxu0 0.0
    %2095 = vmatprep.subr.mxu0 0.0
    %2096 = vmatpush2.msra.mxu0 0.0
    %2097 = vmatprep.subr.mxu0 0.0
    %2098 = vmatpush2.msra.mxu0 0.0
    %2099 = vmatprep.mubr.f32.mxu0 0.0
    %2100 = vmatmul.mubr.f32.gmra.mxu0 %v2030
    %v2101 = vpop.f32.mrf.mxu0
    %v2102 = vadd.f32 %v2028, %v2101
    %v2103 = vpop.f32.mrf.mxu0
    %2104 = vmatprep.mubr.f32.mxu0 0.0
    %2105 = vmatmul.mubr.f32.gmra.mxu0 %v2033
    %v2106 = vpop.f32.mrf.mxu0
    %v2107 = vadd.f32 %v2028, %v2106
    %v2108 = vpop.f32.mrf.mxu0
    %2109 = vdwg.mxu0
    %v2110 = vadd.f32 %v1936, %v2102
    %v2111 = vadd.f32 %v1937, %v2107
    %v2112 = vsel %vm134, %v2110, 0.0
    %2113 = vadd.xlane.f32.xlu0 %v2112
    %v2114 = vpop.xlane.xlu0 %2113
    %v2115 = vsel %vm134, %v2111, 0.0
    %2116 = vadd.xlane.f32.xlu0 %v2115
    %v2117 = vpop.xlane.xlu0 %2116
    %v2118 = vmul.f32 %v2114, %v907
    %v2119 = vmul.f32 %v2117, %v907
    %v2120 = vsub.f32 %v2110, %v2118
    %v2121 = vsub.f32 %v2111, %v2119
    %v2122 = vmul.f32 %v2120, %v2120
    %v2123 = vmul.f32 %v2121, %v2121
    %v2124 = vsel %vm134, %v2122, 0.0
    %2125 = vadd.xlane.f32.xlu0 %v2124
    %v2126 = vpop.xlane.xlu0 %2125
    %v2127 = vsel %vm134, %v2123, 0.0
    %2128 = vadd.xlane.f32.xlu0 %v2127
    %v2129 = vpop.xlane.xlu0 %2128
    %v2130 = vmul.f32 %v2126, %v907
    %v2131 = vmul.f32 %v2129, %v907
    %v2132 = vadd.f32 %v2130, 1e-05
    %v2133 = vadd.f32 %v2131, 1e-05
    %v2134 = vrsqrt.pop %v2132
    %v2135 = vrsqrt.pop %v2133
    %v2136 = vmul.f32 %v2120, %v2134
    %v2137 = vmul.f32 %v2121, %v2135
    %v2138 = vlaneseq
    %v2139 = vshrl.u32 %v2138, 7
    %v2140 = vsub.s32 6, %v2139
    %v2141 = vrot.slane %v1169, %v2140
    %v2142 = vmul.f32 %v2136, %v2141
    %v2143 = vmul.f32 %v2137, %v2141
    %v2144 = vlaneseq
    %v2145 = vshrl.u32 %v2144, 7
    %v2146 = vsub.s32 7, %v2145
    %v2147 = vrot.slane %v1169, %v2146
    %v2148 = vadd.f32 %v2142, %v2147
    %v2149 = vadd.f32 %v2143, %v2147
    %v2150 = vld [vmem:[#allocation7 + $0x198] sm:$0xff]
    %v2151 = vsel %vm134, %v2148, 0.0
    %2152 = vadd.xlane.f32.xlu0 %v2151
    %v2153 = vpop.xlane.xlu0 %2152
    %v2154 = vsel %vm134, %v2149, 0.0
    %2155 = vadd.xlane.f32.xlu0 %v2154
    %v2156 = vpop.xlane.xlu0 %2155
    %v2157 = vmul.f32 %v2153, %v907
    %v2158 = vmul.f32 %v2156, %v907
    %v2159 = vsub.f32 %v2148, %v2157
    %v2160 = vsub.f32 %v2149, %v2158
    %v2161 = vmul.f32 %v2159, %v2159
    %v2162 = vmul.f32 %v2160, %v2160
    %v2163 = vsel %vm134, %v2161, 0.0
    %2164 = vadd.xlane.f32.xlu0 %v2163
    %v2165 = vpop.xlane.xlu0 %2164
    %v2166 = vsel %vm134, %v2162, 0.0
    %2167 = vadd.xlane.f32.xlu0 %v2166
    %v2168 = vpop.xlane.xlu0 %2167
    %v2169 = vmul.f32 %v2165, %v907
    %v2170 = vmul.f32 %v2168, %v907
    %v2171 = vadd.f32 %v2169, 1e-05
    %v2172 = vadd.f32 %v2170, 1e-05
    %v2173 = vrsqrt.pop %v2171
    %v2174 = vrsqrt.pop %v2172
    %v2175 = vmul.f32 %v2159, %v2173
    %v2176 = vmul.f32 %v2160, %v2174
    %v2177 = vlaneseq
    %v2178 = vshrl.u32 %v2177, 7
    %v2179 = vsub.s32 0, %v2178
    %v2180 = vrot.slane %v2150, %v2179
    %v2181 = vmul.f32 %v2175, %v2180
    %v2182 = vmul.f32 %v2176, %v2180
    %v2183 = vlaneseq
    %v2184 = vshrl.u32 %v2183, 7
    %v2185 = vsub.s32 1, %v2184
    %v2186 = vrot.slane %v2150, %v2185
    %v2187 = vadd.f32 %v2181, %v2186
    %v2188 = vadd.f32 %v2182, %v2186
    %v2189 = vsel %vm134, %v2187, 0.0
    %v2190 = vrot.slane %v2189, 4
    %v2191 = vadd.f32 %v2189, %v2190
    %v2192 = vrot.slane %v2191, 2
    %v2193 = vadd.f32 %v2191, %v2192
    %v2194 = vrot.slane %v2193, 1
    %v2195 = vadd.f32 %v2193, %v2194
    %v2196 = vsel %vm134, %v2188, 0.0
    %v2197 = vrot.slane %v2196, 4
    %v2198 = vadd.f32 %v2196, %v2197
    %v2199 = vrot.slane %v2198, 2
    %v2200 = vadd.f32 %v2198, %v2199
    %v2201 = vrot.slane %v2200, 1
    %v2202 = vadd.f32 %v2200, %v2201
    %v2203 = vrcp.pop 8.0
    %v2204 = vmul.f32 %v2195, %v2203
    %v2205 = vmul.f32 %v2202, %v2203
    %v2206 = vld [vmem:[#allocation7 + $0x168] sm:$0xff]
    %v2207 = vld [vmem:[#allocation7 + $0x170] sm:$0xff]
    %v2208 = vld [vmem:[#allocation7 + $0x178] sm:$0xff]
    %v2209 = vld [vmem:[#allocation7 + $0x180] sm:$0xff]
    %v2210 = vlaneseq
    %v2211 = vshrl.u32 %v2210, 7
    %v2212 = vsub.s32 2, %v2211
    %v2213 = vrot.slane %v2150, %v2212
    %vm2216 = vcmask 1041409
    %v2217 = vsel %vm2216, %v2205, %v2204
    %v2218 = vsel %vm134, %v2217, 0
    %2220 = vmatprep.subr.mxu0 0.0
    %2221 = vmatpush1.msra.mxu0 0.0
    %2222 = vmatprep.subr.mxu0 0.0
    %2223 = vmatpush1.msra.mxu0 0.0
    %2224 = vmatprep.subr.mxu0 0.0
    %2225 = vmatpush1.msra.mxu0 0.0
    %2226 = vmatprep.subr.mxu0 0.0
    %2227 = vmatpush1.msra.mxu0 0.0
    %2228 = vmatprep.subr.mxu0 0.0
    %2229 = vmatpush1.msra.mxu0 0.0
    %2230 = vmatprep.subr.mxu0 0.0
    %2231 = vmatpush1.msra.mxu0 0.0
    %2232 = vmatprep.subr.mxu0 0.0
    %2233 = vmatpush1.msra.mxu0 0.0
    %2234 = vmatprep.subr.mxu0 0.0
    %2235 = vmatpush1.msra.mxu0 0.0
    %2236 = vmatprep.subr.mxu0 0.0
    %2237 = vmatpush1.msra.mxu0 0.0
    %2238 = vmatprep.subr.mxu0 0.0
    %2239 = vmatpush1.msra.mxu0 0.0
    %2240 = vmatprep.subr.mxu0 0.0
    %2241 = vmatpush1.msra.mxu0 0.0
    %2242 = vmatprep.subr.mxu0 0.0
    %2243 = vmatpush1.msra.mxu0 0.0
    %2244 = vmatprep.subr.mxu0 0.0
    %2245 = vmatpush1.msra.mxu0 %v2209
    %2246 = vmatprep.subr.mxu0 0.0
    %2247 = vmatpush1.msra.mxu0 %v2208
    %2248 = vmatprep.subr.mxu0 0.0
    %2249 = vmatpush1.msra.mxu0 %v2207
    %2250 = vmatprep.subr.mxu0 0.0
    %2251 = vmatpush1.msra.mxu0 %v2206
    %2252 = vmatprep.subr.mxu0 0.0
    %2253 = vmatpush2.msra.mxu0 0.0
    %2254 = vmatprep.subr.mxu0 0.0
    %2255 = vmatpush2.msra.mxu0 0.0
    %2256 = vmatprep.subr.mxu0 0.0
    %2257 = vmatpush2.msra.mxu0 0.0
    %2258 = vmatprep.subr.mxu0 0.0
    %2259 = vmatpush2.msra.mxu0 0.0
    %2260 = vmatprep.subr.mxu0 0.0
    %2261 = vmatpush2.msra.mxu0 0.0
    %2262 = vmatprep.subr.mxu0 0.0
    %2263 = vmatpush2.msra.mxu0 0.0
    %2264 = vmatprep.subr.mxu0 0.0
    %2265 = vmatpush2.msra.mxu0 0.0
    %2266 = vmatprep.subr.mxu0 0.0
    %2267 = vmatpush2.msra.mxu0 0.0
    %2268 = vmatprep.subr.mxu0 0.0
    %2269 = vmatpush2.msra.mxu0 0.0
    %2270 = vmatprep.subr.mxu0 0.0
    %2271 = vmatpush2.msra.mxu0 0.0
    %2272 = vmatprep.subr.mxu0 0.0
    %2273 = vmatpush2.msra.mxu0 0.0
    %2274 = vmatprep.subr.mxu0 0.0
    %2275 = vmatpush2.msra.mxu0 0.0
    %2276 = vmatprep.subr.mxu0 0.0
    %2277 = vmatpush2.msra.mxu0 0.0
    %2278 = vmatprep.subr.mxu0 0.0
    %2279 = vmatpush2.msra.mxu0 0.0
    %2280 = vmatprep.subr.mxu0 0.0
    %2281 = vmatpush2.msra.mxu0 0.0
    %2282 = vmatprep.subr.mxu0 0.0
    %2283 = vmatpush2.msra.mxu0 0.0
    %2284 = vmatprep.mubr.f32.mxu0 0.0
    %2285 = vmatmul.mubr.f32.gmra.mxu0 %v2218
    %v2286 = vpop.f32.mrf.mxu0
    %v2287 = vadd.f32 %v2213, %v2286
    %v2288 = vpop.f32.mrf.mxu0
    %2289 = vdwg.mxu0
    %2290 = vst [vmem:[#allocation8] sm:$0x3] %v2287
    // Predicated region
    $region18: #{transformer_encoder_only_forward.1} parent=1 // pred_check
      _
    $region19: #{transformer_encoder_only_forward.1} parent=1 // pred_check_branch
      %2292 = sbr.rel (0) target = $region21
    $region20: #{transformer_encoder_only_forward.1} parent=1 // pred_region
      %s2294 = ssub.s32 32, 32
      %2295 = vsyncadd [#allocation5], %s2294
      %s2297 = sshll.u32 [#allocation8], 4
      %s2298 = int_to_ptr.vmem [resolvable:$true] %s2297
      %2300 = dma.vmem_to_hbm [thread:$0]  %s2298, 32, %s2, [#allocation5]
    $region21: #{transformer_encoder_only_forward.1} parent=1 // pred_fallthru
      _
    // Predicated region
    $region22: #{transformer_encoder_only_forward.1} parent=1 // pred_check
      _
    $region23: #{transformer_encoder_only_forward.1} parent=1 // pred_check_branch
      %2302 = sbr.rel (0) target = $region25
    $region24: #{transformer_encoder_only_forward.1} parent=1 // pred_region
      %2303 = dma.done [#allocation5], 32
    $region25: #{transformer_encoder_only_forward.1} parent=1 // pred_fallthru
      _
    %2304 = vsyncpa [#allocation4], 1
    %2305 = vsyncpa [#allocation5], 1
    %2306 = vsyncpa [#allocation6], 1

</llo_original>
